<compile_context>
chip_gen: v7x
topology: tpu7x:2x2x1
jax: 0.10.0
libtpu: 0.0.40
codegen_flags: <defaults>
</compile_context>

<pallas_src>
import functools
import math

import jax
import jax.numpy as jnp
from jax.experimental import pallas as pl
from jax.experimental.pallas import tpu as pltpu

EPS = 1e-6


def _layer_norm_ref(x, a, b, eps=EPS):
    """a*(x-mean)/(std+eps)+b with unbiased (ddof=1) std — pure-JAX reference."""
    d = x.shape[-1]
    mean = jnp.mean(x, axis=-1, keepdims=True)
    var = jnp.sum((x - mean) ** 2, axis=-1, keepdims=True) / (d - 1)
    std = jnp.sqrt(var)
    return a * (x - mean) / (std + eps) + b


def _layer_norm(x, a, b, eps=EPS):
    """In-kernel LayerNorm: divide replaced by exact reciprocal-multiply."""
    d = x.shape[-1]
    mean = jnp.mean(x, axis=-1, keepdims=True)
    var = jnp.sum((x - mean) ** 2, axis=-1, keepdims=True) / (d - 1)
    std = jnp.sqrt(var)
    inv = pl.reciprocal(std + eps, approx=False)
    return a * (x - mean) * inv + b


# ---------------------------------------------------------------------------
# Fused Pallas kernel: whole encoder stack (+ final norm) for one batch row.
# grid = (batch, layer); activation carried in VMEM scratch across layers;
# big weights VMEM-resident for the whole kernel.
# ---------------------------------------------------------------------------
def encoder_stack_kernel(x_ref, mask_ref,
                         wqkv_ref, wo_ref, w1_ref, w2_ref,
                         bqkv_ref, bo_ref, b1_ref, b2_ref,
                         ln1a_ref, ln1b_ref, ln2a_ref, ln2b_ref,
                         fina_ref, finb_ref,
                         out_ref, xs_ref, ctx_ref,
                         *, num_heads, compute_dtype):
    layer = pl.program_id(1)
    n_layers = pl.num_programs(1)

    # Load the input activation into the resident f32 scratch at layer 0.
    @pl.when(layer == 0)
    def _init():
        xs_ref[...] = x_ref[...].astype(jnp.float32)

    x = xs_ref[...]                                   # (S, D) f32
    S, D = x.shape
    H = num_heads
    dk = D // H
    inv_sqrt_dk = jnp.float32(1.0 / math.sqrt(dk))

    # Additive attention bias: 0 where attendable, -1e9 where masked.
    # Computed once per layer (hoisted out of the head loop).
    bias = (mask_ref[...] - 1.0) * jnp.float32(1e9)   # (1, S) -> bcast over queries

    # Per-layer weights, dynamically sliced out of the VMEM-resident stacks
    # (DMA'd from HBM once per kernel, NOT once per (batch, layer) step).
    wqkv = wqkv_ref[layer]                            # (D, 3D) compute dtype
    wo = wo_ref[layer]                                # (D, D)
    w1 = w1_ref[layer]                                # (D, dff)
    w2 = w2_ref[layer]                                # (dff, D)

    # ---- self-attention sublayer: x + Attn(LN(x))  (dropout = identity) ----
    xn = _layer_norm(x, ln1a_ref[...], ln1b_ref[...]).astype(compute_dtype)
    # Fused QKV projection: one (S,D)@(D,3D) MXU stream instead of three.
    qkv = jnp.dot(xn, wqkv, preferred_element_type=jnp.float32) + bqkv_ref[...]
    q = qkv[:, 0:D].astype(compute_dtype)
    kT = jnp.transpose(qkv[:, D:2 * D]).astype(compute_dtype)   # (D, S): 1 transpose/layer
    v = qkv[:, 2 * D:3 * D].astype(compute_dtype)

    # Per-head attention; each head's context is stored into a lane slice of
    # the (S, D) ctx scratch so the output projection is ONE K=D matmul and
    # there is no unrolled functional accumulation keeping values live.
    for h in range(H):
        c0 = h * dk
        s = jnp.dot(q[:, c0:c0 + dk], kT[c0:c0 + dk, :],
                    preferred_element_type=jnp.float32) * inv_sqrt_dk
        s = s + bias
        s = s - jnp.max(s, axis=-1, keepdims=True)
        p = jnp.exp(s)
        p = p * pl.reciprocal(jnp.sum(p, axis=-1, keepdims=True), approx=True)
        ctx_ref[:, c0:c0 + dk] = jnp.dot(p.astype(compute_dtype), v[:, c0:c0 + dk],
                                         preferred_element_type=jnp.float32)

    attn = jnp.dot(ctx_ref[...].astype(compute_dtype), wo,
                   preferred_element_type=jnp.float32) + bo_ref[...]
    x = x + attn

    # ---- feed-forward sublayer: x + FFN(LN(x))  (dropout = identity) ----
    xn2 = _layer_norm(x, ln2a_ref[...], ln2b_ref[...]).astype(compute_dtype)
    # Cast right after the ReLU: halves the live (S, dff) intermediate.
    h1 = jnp.maximum(
        jnp.dot(xn2, w1, preferred_element_type=jnp.float32) + b1_ref[...],
        0.0).astype(compute_dtype)
    ff = jnp.dot(h1, w2, preferred_element_type=jnp.float32) + b2_ref[...]
    x = x + ff

    xs_ref[...] = x

    # Fused final LayerNorm on the last layer step; single lane-dense store.
    @pl.when(layer == n_layers - 1)
    def _finalize():
        out_ref[...] = _layer_norm(
            x, fina_ref[...], finb_ref[...]).astype(out_ref.dtype)


# ---------------------------------------------------------------------------
# Wrapper: fuse QKV weights, stack per-layer params along a leading layer
# axis, keep big matrices VMEM-resident, launch a single pallas_call.
# ---------------------------------------------------------------------------
def encoder_forward(x, mask, layer_params, final_a, final_b, *, num_heads,
                    compute_dtype=jnp.bfloat16):
    """Encoder.forward: x through each layer, then final LayerNorm."""
    B, S, D = x.shape
    N = len(layer_params)
    dff = layer_params[0][8].shape[-1]
    f32 = jnp.float32

    # Big matrices (MXU operands) -> compute_dtype; biases / LN params -> f32.
    wqkv = jnp.stack([jnp.concatenate([p[0], p[2], p[4]], axis=1)
                      for p in layer_params]).astype(compute_dtype)     # (N, D, 3D)
    wo = jnp.stack([p[6] for p in layer_params]).astype(compute_dtype)  # (N, D, D)
    w1 = jnp.stack([p[8] for p in layer_params]).astype(compute_dtype)  # (N, D, dff)
    w2 = jnp.stack([p[10] for p in layer_params]).astype(compute_dtype) # (N, dff, D)
    bqkv = jnp.stack([jnp.concatenate([p[1], p[3], p[5]], axis=1)
                      for p in layer_params]).astype(f32)               # (N, 1, 3D)
    bo = jnp.stack([p[7] for p in layer_params]).astype(f32)            # (N, 1, D)
    b1 = jnp.stack([p[9] for p in layer_params]).astype(f32)            # (N, 1, dff)
    b2 = jnp.stack([p[11] for p in layer_params]).astype(f32)           # (N, 1, D)
    l1a = jnp.stack([p[12] for p in layer_params]).astype(f32)
    l1b = jnp.stack([p[13] for p in layer_params]).astype(f32)
    l2a = jnp.stack([p[14] for p in layer_params]).astype(f32)
    l2b = jnp.stack([p[15] for p in layer_params]).astype(f32)

    big_weights = (wqkv, wo, w1, w2)
    small_params = (bqkv, bo, b1, b2, l1a, l1b, l2a, l2b)

    # Big matrices: full stacked block with a constant index_map -> fetched
    # from HBM once per kernel, indexed with `layer` inside the kernel.
    def resident_spec(p):
        return pl.BlockSpec(p.shape, lambda b, l: (0, 0, 0))

    # Small per-layer params (biases / LayerNorm): tiny, streamed per layer.
    def per_layer_spec(p):
        return pl.BlockSpec((None,) + p.shape[1:], lambda b, l: (l, 0, 0))

    in_specs = (
        [pl.BlockSpec((None, S, D), lambda b, l: (b, 0, 0)),   # x: one batch row
         pl.BlockSpec((None, 1, S), lambda b, l: (b, 0, 0))]   # mask row
        + [resident_spec(p) for p in big_weights]
        + [per_layer_spec(p) for p in small_params]
        + [pl.BlockSpec((1, D), lambda b, l: (0, 0)),          # final LN a
           pl.BlockSpec((1, D), lambda b, l: (0, 0))]          # final LN b
    )

    weight_bytes = sum(int(p.size) * p.dtype.itemsize for p in big_weights)
    small_bytes = sum(int(p.size) * p.dtype.itemsize for p in small_params)

    flops = int(B * N * (6 * S * D * D        # fused QKV projection
                         + 4 * S * S * D      # scores + p@v across heads
                         + 2 * S * D * D      # output projection
                         + 4 * S * D * dff))  # FFN
    transcendentals = int(B * N * num_heads * S * (S + 1))
    bytes_accessed = int(2 * x.size * x.dtype.itemsize
                         + mask.size * mask.dtype.itemsize
                         + weight_bytes                        # resident: read once
                         + B * small_bytes                     # per-(b,l) streamed
                         + final_a.size * 4 + final_b.size * 4)

    # Explicit VMEM budget: 2x (double-buffered) resident weights + scratch
    # + headroom, clamped to v7x's 64 MiB physical VMEM per TensorCore.
    scratch_bytes = S * D * 8                                  # two f32 (S, D) slabs
    vmem_limit = min(64 << 20,
                     max(32 << 20, 2 * weight_bytes + scratch_bytes + (8 << 20)))

    # TODO(synk): for production sizes (D=512, dff=2048, S>=1024, many layers)
    # where N x per-layer weights exceeds the VMEM budget, stream one layer's
    # weights at a time (manual double-buffer / per-layer index_map), tile the
    # attention flash-style over keys and the FFN over dff blocks.
    return pl.pallas_call(
        functools.partial(encoder_stack_kernel, num_heads=num_heads,
                          compute_dtype=compute_dtype),
        out_shape=jax.ShapeDtypeStruct((B, S, D), x.dtype),
        grid=(B, N),
        in_specs=in_specs,
        out_specs=pl.BlockSpec((None, S, D), lambda b, l: (b, 0, 0)),
        scratch_shapes=[pltpu.VMEM((S, D), jnp.float32),       # resident activation
                        pltpu.VMEM((S, D), jnp.float32)],      # per-head ctx slab
        compiler_params=pltpu.CompilerParams(
            dimension_semantics=("parallel", "arbitrary"),
            vmem_limit_bytes=int(vmem_limit)),
        cost_estimate=pl.CostEstimate(flops=flops,
                                      transcendentals=transcendentals,
                                      bytes_accessed=bytes_accessed),
    )(x, mask, wqkv, wo, w1, w2, bqkv, bo, b1, b2, l1a, l1b, l2a, l2b,
      final_a, final_b)


# ---------------------------------------------------------------------------
# Deterministic parameter init + pure-JAX (f32) reference
# ---------------------------------------------------------------------------
def init_layer_params(key, D, dff):
    ks = jax.random.split(key, 12)

    def lin(kw, kb, fin, fout):
        w = jax.random.normal(kw, (fin, fout), jnp.float32) / jnp.sqrt(fin)
        b = 0.01 * jax.random.normal(kb, (1, fout), jnp.float32)
        return w, b

    wq, bq = lin(ks[0], ks[1], D, D)
    wk, bk = lin(ks[2], ks[3], D, D)
    wv, bv = lin(ks[4], ks[5], D, D)
    wo, bo = lin(ks[6], ks[7], D, D)
    w1, b1 = lin(ks[8], ks[9], D, dff)
    w2, b2 = lin(ks[10], ks[11], dff, D)
    ln1a = jnp.ones((1, D), jnp.float32)
    ln1b = jnp.zeros((1, D), jnp.float32)
    ln2a = jnp.ones((1, D), jnp.float32)
    ln2b = jnp.zeros((1, D), jnp.float32)
    return (wq, bq, wk, bk, wv, bv, wo, bo, w1, b1, w2, b2, ln1a, ln1b, ln2a, ln2b)


def reference_forward(x, mask, layer_params, final_a, final_b, num_heads):
    B, S, D = x.shape
    dk = D // num_heads
    m4 = mask[:, None, :, :]  # (B, 1, 1, S)

    for (wq, bq, wk, bk, wv, bv, wo, bo, w1, b1, w2, b2,
         l1a, l1b, l2a, l2b) in layer_params:
        xn = _layer_norm_ref(x, l1a, l1b)
        q = (xn @ wq + bq).reshape(B, S, num_heads, dk).transpose(0, 2, 1, 3)
        k = (xn @ wk + bk).reshape(B, S, num_heads, dk).transpose(0, 2, 1, 3)
        v = (xn @ wv + bv).reshape(B, S, num_heads, dk).transpose(0, 2, 1, 3)
        scores = jnp.einsum('bhqd,bhkd->bhqk', q, k) / jnp.sqrt(jnp.float32(dk))
        scores = jnp.where(m4 > 0, scores, -1e9)
        p = jax.nn.softmax(scores, axis=-1)
        attn = jnp.einsum('bhqk,bhkd->bhqd', p, v).transpose(0, 2, 1, 3).reshape(B, S, D)
        x = x + (attn @ wo + bo)
        xn2 = _layer_norm_ref(x, l2a, l2b)
        x = x + (jnp.maximum(xn2 @ w1 + b1, 0.0) @ w2 + b2)
    return _layer_norm_ref(x, final_a, final_b)


# ---------------------------------------------------------------------------
if __name__ == "__main__":
    B, S, D = 2, 8, 32          # batch, seq, d_model
    NUM_HEADS, DFF, N_LAYERS = 4, 64, 2

    key = jax.random.PRNGKey(0)
    kx, kp = jax.random.split(key)

    x = jax.random.normal(kx, (B, S, D), jnp.float32)
    # mask: (B, 1, S); batch 1 has its last two key positions masked out.
    mask = jnp.ones((B, 1, S), jnp.float32).at[1, 0, S - 2:].set(0.0)

    layer_params = [init_layer_params(jax.random.fold_in(kp, i), D, DFF)
                    for i in range(N_LAYERS)]
    final_a = jnp.ones((1, D), jnp.float32)
    final_b = jnp.zeros((1, D), jnp.float32)

    ref = reference_forward(x, mask, layer_params, final_a, final_b, NUM_HEADS)

    # Fast path: bf16 MXU operands, f32 accumulation.
    out_bf16 = encoder_forward(x, mask, layer_params, final_a, final_b,
                               num_heads=NUM_HEADS, compute_dtype=jnp.bfloat16)
    out_bf16 = jax.block_until_ready(out_bf16)

    # Structural check with f32 operands (tight tolerance; not bit-exact since
    # the softmax denominator uses an approximate EUP reciprocal).
    out_f32 = encoder_forward(x, mask, layer_params, final_a, final_b,
                              num_heads=NUM_HEADS, compute_dtype=jnp.float32)
    out_f32 = jax.block_until_ready(out_f32)

    assert out_bf16.shape == (B, S, D) and out_f32.shape == (B, S, D)
    assert bool(jnp.all(jnp.isfinite(out_bf16)))
    assert bool(jnp.all(jnp.isfinite(out_f32)))
    assert bool(jnp.allclose(out_f32, ref, atol=1e-2, rtol=1e-2)), \
        f"f32 path max abs diff {float(jnp.max(jnp.abs(out_f32 - ref)))}"
    assert bool(jnp.allclose(out_bf16, ref, atol=1e-1, rtol=1e-1)), \
        f"bf16 path max abs diff {float(jnp.max(jnp.abs(out_bf16 - ref)))}"

    print("KERNEL_OK")
</pallas_src>

<mosaic_0001>
module attributes {stable_mosaic.version = 11 : i64} {
  func.func @encoder_stack_kernel(%arg0: i32, %arg1: i32, %arg2: memref<1x8x32xf32, #tpu.memory_space<vmem>>, %arg3: memref<1x1x8xf32, #tpu.memory_space<vmem>>, %arg4: memref<2x32x96xbf16, #tpu.memory_space<vmem>>, %arg5: memref<2x32x32xbf16, #tpu.memory_space<vmem>>, %arg6: memref<2x32x64xbf16, #tpu.memory_space<vmem>>, %arg7: memref<2x64x32xbf16, #tpu.memory_space<vmem>>, %arg8: memref<1x1x96xf32, #tpu.memory_space<vmem>>, %arg9: memref<1x1x32xf32, #tpu.memory_space<vmem>>, %arg10: memref<1x1x64xf32, #tpu.memory_space<vmem>>, %arg11: memref<1x1x32xf32, #tpu.memory_space<vmem>>, %arg12: memref<1x1x32xf32, #tpu.memory_space<vmem>>, %arg13: memref<1x1x32xf32, #tpu.memory_space<vmem>>, %arg14: memref<1x1x32xf32, #tpu.memory_space<vmem>>, %arg15: memref<1x1x32xf32, #tpu.memory_space<vmem>>, %arg16: memref<1x32xf32, #tpu.memory_space<vmem>>, %arg17: memref<1x32xf32, #tpu.memory_space<vmem>>, %arg18: memref<1x8x32xf32, #tpu.memory_space<vmem>>, %arg19: memref<8x32xf32, #tpu.memory_space<vmem>>, %arg20: memref<8x32xf32, #tpu.memory_space<vmem>>) attributes {dimension_semantics = [#tpu.dimension_semantics<parallel>, #tpu.dimension_semantics<arbitrary>], iteration_bounds = array<i64: 2, 2>, scalar_prefetch = 0 : i64, scratch_operands = 2 : i64, tpu.core_type = #tpu.core_type<tc>, window_params = [{transform_indices = @transform_0, window_bounds = array<i64: 1, 8, 32>}, {transform_indices = @transform_1, window_bounds = array<i64: 1, 1, 8>}, {pipeline_mode = #tpu.pipeline_mode<synchronous>, transform_indices = @transform_2, window_bounds = array<i64: 2, 32, 96>}, {pipeline_mode = #tpu.pipeline_mode<synchronous>, transform_indices = @transform_3, window_bounds = array<i64: 2, 32, 32>}, {pipeline_mode = #tpu.pipeline_mode<synchronous>, transform_indices = @transform_4, window_bounds = array<i64: 2, 32, 64>}, {pipeline_mode = #tpu.pipeline_mode<synchronous>, transform_indices = @transform_5, window_bounds = array<i64: 2, 64, 32>}, {transform_indices = @transform_6, window_bounds = array<i64: 1, 1, 96>}, {transform_indices = @transform_7, window_bounds = array<i64: 1, 1, 32>}, {transform_indices = @transform_8, window_bounds = array<i64: 1, 1, 64>}, {transform_indices = @transform_9, window_bounds = array<i64: 1, 1, 32>}, {transform_indices = @transform_10, window_bounds = array<i64: 1, 1, 32>}, {transform_indices = @transform_11, window_bounds = array<i64: 1, 1, 32>}, {transform_indices = @transform_12, window_bounds = array<i64: 1, 1, 32>}, {transform_indices = @transform_13, window_bounds = array<i64: 1, 1, 32>}, {pipeline_mode = #tpu.pipeline_mode<synchronous>, transform_indices = @transform_14, window_bounds = array<i64: 1, 32>}, {pipeline_mode = #tpu.pipeline_mode<synchronous>, transform_indices = @transform_15, window_bounds = array<i64: 1, 32>}, {transform_indices = @transform_16, window_bounds = array<i64: 1, 8, 32>}]} {
    %c0_i32 = arith.constant 0 : i32
    %0 = arith.cmpi eq, %arg1, %c0_i32 : i32
    %1 = arith.extui %0 : i1 to i32
    %c0_i32_0 = arith.constant 0 : i32
    %2 = arith.cmpi ne, %1, %c0_i32_0 : i32
    scf.if %2 {
      %c0_83 = arith.constant 0 : index
      %c0_84 = arith.constant 0 : index
      %c0_85 = arith.constant 0 : index
      %200 = vector.load %arg2[%c0_83, %c0_84, %c0_85] : memref<1x8x32xf32, #tpu.memory_space<vmem>>, vector<1x8x32xf32>
      %201 = vector.shape_cast %200 : vector<1x8x32xf32> to vector<8x32xf32>
      %c0_86 = arith.constant 0 : index
      %c0_87 = arith.constant 0 : index
      %202 = vector.load %arg19[%c0_86, %c0_87] : memref<8x32xf32, #tpu.memory_space<vmem>>, vector<8x32xf32>
      tpu.vector_store %arg19[%c0_86, %c0_87], %201 {strides = array<i32>} : memref<8x32xf32, #tpu.memory_space<vmem>>, vector<8x32xf32>,
    } else {
    }
    %c0 = arith.constant 0 : index
    %c0_1 = arith.constant 0 : index
    %3 = vector.load %arg19[%c0, %c0_1] : memref<8x32xf32, #tpu.memory_space<vmem>>, vector<8x32xf32>
    %c0_2 = arith.constant 0 : index
    %c0_3 = arith.constant 0 : index
    %c0_4 = arith.constant 0 : index
    %4 = vector.load %arg3[%c0_2, %c0_3, %c0_4] : memref<1x1x8xf32, #tpu.memory_space<vmem>>, vector<1x1x8xf32>
    %5 = vector.shape_cast %4 : vector<1x1x8xf32> to vector<1x8xf32>
    %cst = arith.constant 1.000000e+00 : f32
    %6 = vector.broadcast %cst : f32 to vector<1x8xf32>
    %7 = arith.subf %5, %6 : vector<1x8xf32>
    %cst_5 = arith.constant 1.000000e+09 : f32
    %8 = vector.broadcast %cst_5 : f32 to vector<1x8xf32>
    %9 = arith.mulf %7, %8 : vector<1x8xf32>
    %10 = arith.index_cast %arg1 : i32 to index
    %c0_6 = arith.constant 0 : index
    %c0_7 = arith.constant 0 : index
    %11 = vector.load %arg4[%10, %c0_6, %c0_7] : memref<2x32x96xbf16, #tpu.memory_space<vmem>>, vector<1x32x96xbf16>
    %12 = vector.shape_cast %11 : vector<1x32x96xbf16> to vector<32x96xbf16>
    %13 = arith.index_cast %arg1 : i32 to index
    %c0_8 = arith.constant 0 : index
    %c0_9 = arith.constant 0 : index
    %14 = vector.load %arg5[%13, %c0_8, %c0_9] : memref<2x32x32xbf16, #tpu.memory_space<vmem>>, vector<1x32x32xbf16>
    %15 = vector.shape_cast %14 : vector<1x32x32xbf16> to vector<32x32xbf16>
    %16 = arith.index_cast %arg1 : i32 to index
    %c0_10 = arith.constant 0 : index
    %c0_11 = arith.constant 0 : index
    %17 = vector.load %arg6[%16, %c0_10, %c0_11] : memref<2x32x64xbf16, #tpu.memory_space<vmem>>, vector<1x32x64xbf16>
    %18 = vector.shape_cast %17 : vector<1x32x64xbf16> to vector<32x64xbf16>
    %19 = arith.index_cast %arg1 : i32 to index
    %c0_12 = arith.constant 0 : index
    %c0_13 = arith.constant 0 : index
    %20 = vector.load %arg7[%19, %c0_12, %c0_13] : memref<2x64x32xbf16, #tpu.memory_space<vmem>>, vector<1x64x32xbf16>
    %21 = vector.shape_cast %20 : vector<1x64x32xbf16> to vector<64x32xbf16>
    %c0_14 = arith.constant 0 : index
    %c0_15 = arith.constant 0 : index
    %c0_16 = arith.constant 0 : index
    %22 = vector.load %arg12[%c0_14, %c0_15, %c0_16] : memref<1x1x32xf32, #tpu.memory_space<vmem>>, vector<1x1x32xf32>
    %23 = vector.shape_cast %22 : vector<1x1x32xf32> to vector<1x32xf32>
    %c0_17 = arith.constant 0 : index
    %c0_18 = arith.constant 0 : index
    %c0_19 = arith.constant 0 : index
    %24 = vector.load %arg13[%c0_17, %c0_18, %c0_19] : memref<1x1x32xf32, #tpu.memory_space<vmem>>, vector<1x1x32xf32>
    %25 = vector.shape_cast %24 : vector<1x1x32xf32> to vector<1x32xf32>
    %cst_20 = arith.constant dense<0.000000e+00> : vector<8xf32>
    %26 = vector.multi_reduction <add>, %3, %cst_20 [1] : vector<8x32xf32> to vector<8xf32>
    %27 = vector.shape_cast %26 : vector<8xf32> to vector<8x1xf32>
    %cst_21 = arith.constant 3.200000e+01 : f32
    %28 = vector.broadcast %cst_21 : f32 to vector<8x1xf32>
    %29 = arith.divf %27, %28 : vector<8x1xf32>
    %30 = vector.broadcast %29 : vector<8x1xf32> to vector<8x32xf32>
    %31 = arith.subf %3, %30 : vector<8x32xf32>
    %32 = arith.mulf %31, %31 : vector<8x32xf32>
    %cst_22 = arith.constant dense<0.000000e+00> : vector<8xf32>
    %33 = vector.multi_reduction <add>, %32, %cst_22 [1] : vector<8x32xf32> to vector<8xf32>
    %34 = vector.shape_cast %33 : vector<8xf32> to vector<8x1xf32>
    %cst_23 = arith.constant 3.100000e+01 : f32
    %35 = vector.broadcast %cst_23 : f32 to vector<8x1xf32>
    %36 = arith.divf %34, %35 : vector<8x1xf32>
    %37 = math.sqrt %36 : vector<8x1xf32>
    %cst_24 = arith.constant 9.99999997E-7 : f32
    %38 = vector.broadcast %cst_24 : f32 to vector<8x1xf32>
    %39 = arith.addf %37, %38 : vector<8x1xf32>
    %40 = tpu.reciprocal %39 : vector<8x1xf32> -> vector<8x1xf32>
    %41 = vector.broadcast %29 : vector<8x1xf32> to vector<8x32xf32>
    %42 = arith.subf %3, %41 : vector<8x32xf32>
    %43 = vector.broadcast %23 : vector<1x32xf32> to vector<8x32xf32>
    %44 = arith.mulf %43, %42 : vector<8x32xf32>
    %45 = vector.broadcast %40 : vector<8x1xf32> to vector<8x32xf32>
    %46 = arith.mulf %44, %45 : vector<8x32xf32>
    %47 = vector.broadcast %25 : vector<1x32xf32> to vector<8x32xf32>
    %48 = arith.addf %46, %47 : vector<8x32xf32>
    %49 = arith.truncf %48 : vector<8x32xf32> to vector<8x32xbf16>
    %cst_25 = arith.constant dense<0.000000e+00> : vector<8x96xf32>
    %50 = tpu.matmul %49, %12, %cst_25 {dimension_numbers = #tpu.dot_dimension_numbers<[1], [0], [0], [1], [0, 0, 1, 1], [], []>} : vector<8x32xbf16>, vector<32x96xbf16>, vector<8x96xf32> -> vector<8x96xf32>
    %c0_26 = arith.constant 0 : index
    %c0_27 = arith.constant 0 : index
    %c0_28 = arith.constant 0 : index
    %51 = vector.load %arg8[%c0_26, %c0_27, %c0_28] : memref<1x1x96xf32, #tpu.memory_space<vmem>>, vector<1x1x96xf32>
    %52 = vector.shape_cast %51 : vector<1x1x96xf32> to vector<1x96xf32>
    %53 = vector.broadcast %52 : vector<1x96xf32> to vector<8x96xf32>
    %54 = arith.addf %50, %53 : vector<8x96xf32>
    %55 = vector.extract_strided_slice %54 {offsets = [0, 0], sizes = [8, 32], strides = [1, 1]} : vector<8x96xf32> to vector<8x32xf32>
    %56 = arith.truncf %55 : vector<8x32xf32> to vector<8x32xbf16>
    %57 = vector.extract_strided_slice %54 {offsets = [0, 32], sizes = [8, 32], strides = [1, 1]} : vector<8x96xf32> to vector<8x32xf32>
    %58 = tpu.transpose %57, [1, 0] : vector<8x32xf32> -> vector<32x8xf32>
    %59 = arith.truncf %58 : vector<32x8xf32> to vector<32x8xbf16>
    %60 = vector.extract_strided_slice %54 {offsets = [0, 64], sizes = [8, 32], strides = [1, 1]} : vector<8x96xf32> to vector<8x32xf32>
    %61 = arith.truncf %60 : vector<8x32xf32> to vector<8x32xbf16>
    %62 = vector.extract_strided_slice %56 {offsets = [0, 0], sizes = [8, 8], strides = [1, 1]} : vector<8x32xbf16> to vector<8x8xbf16>
    %63 = vector.extract_strided_slice %59 {offsets = [0, 0], sizes = [8, 8], strides = [1, 1]} : vector<32x8xbf16> to vector<8x8xbf16>
    %cst_29 = arith.constant dense<0.000000e+00> : vector<8x8xf32>
    %64 = tpu.matmul %62, %63, %cst_29 {dimension_numbers = #tpu.dot_dimension_numbers<[1], [0], [0], [1], [0, 0, 1, 1], [], []>} : vector<8x8xbf16>, vector<8x8xbf16>, vector<8x8xf32> -> vector<8x8xf32>
    %cst_30 = arith.constant 0.353553385 : f32
    %65 = vector.broadcast %cst_30 : f32 to vector<8x8xf32>
    %66 = arith.mulf %64, %65 : vector<8x8xf32>
    %67 = vector.broadcast %9 : vector<1x8xf32> to vector<8x8xf32>
    %68 = arith.addf %66, %67 : vector<8x8xf32>
    %cst_31 = arith.constant dense<0xFF800000> : vector<8xf32>
    %69 = vector.multi_reduction <maximumf>, %68, %cst_31 [1] : vector<8x8xf32> to vector<8xf32>
    %70 = vector.shape_cast %69 : vector<8xf32> to vector<8x1xf32>
    %71 = vector.broadcast %70 : vector<8x1xf32> to vector<8x8xf32>
    %72 = arith.subf %68, %71 : vector<8x8xf32>
    %73 = math.exp %72 : vector<8x8xf32>
    %cst_32 = arith.constant dense<0.000000e+00> : vector<8xf32>
    %74 = vector.multi_reduction <add>, %73, %cst_32 [1] : vector<8x8xf32> to vector<8xf32>
    %75 = vector.shape_cast %74 : vector<8xf32> to vector<8x1xf32>
    %76 = tpu.reciprocal %75 {approx = true} : vector<8x1xf32> -> vector<8x1xf32>
    %77 = vector.broadcast %76 : vector<8x1xf32> to vector<8x8xf32>
    %78 = arith.mulf %73, %77 : vector<8x8xf32>
    %79 = arith.truncf %78 : vector<8x8xf32> to vector<8x8xbf16>
    %80 = vector.extract_strided_slice %61 {offsets = [0, 0], sizes = [8, 8], strides = [1, 1]} : vector<8x32xbf16> to vector<8x8xbf16>
    %cst_33 = arith.constant dense<0.000000e+00> : vector<8x8xf32>
    %81 = tpu.matmul %79, %80, %cst_33 {dimension_numbers = #tpu.dot_dimension_numbers<[1], [0], [0], [1], [0, 0, 1, 1], [], []>} : vector<8x8xbf16>, vector<8x8xbf16>, vector<8x8xf32> -> vector<8x8xf32>
    %c0_34 = arith.constant 0 : index
    %c0_35 = arith.constant 0 : index
    %82 = vector.load %arg20[%c0_34, %c0_35] : memref<8x32xf32, #tpu.memory_space<vmem>>, vector<8x8xf32>
    tpu.vector_store %arg20[%c0_34, %c0_35], %81 {strides = array<i32>} : memref<8x32xf32, #tpu.memory_space<vmem>>, vector<8x8xf32>,
    %83 = vector.extract_strided_slice %56 {offsets = [0, 8], sizes = [8, 8], strides = [1, 1]} : vector<8x32xbf16> to vector<8x8xbf16>
    %84 = vector.extract_strided_slice %59 {offsets = [8, 0], sizes = [8, 8], strides = [1, 1]} : vector<32x8xbf16> to vector<8x8xbf16>
    %cst_36 = arith.constant dense<0.000000e+00> : vector<8x8xf32>
    %85 = tpu.matmul %83, %84, %cst_36 {dimension_numbers = #tpu.dot_dimension_numbers<[1], [0], [0], [1], [0, 0, 1, 1], [], []>} : vector<8x8xbf16>, vector<8x8xbf16>, vector<8x8xf32> -> vector<8x8xf32>
    %cst_37 = arith.constant 0.353553385 : f32
    %86 = vector.broadcast %cst_37 : f32 to vector<8x8xf32>
    %87 = arith.mulf %85, %86 : vector<8x8xf32>
    %88 = vector.broadcast %9 : vector<1x8xf32> to vector<8x8xf32>
    %89 = arith.addf %87, %88 : vector<8x8xf32>
    %cst_38 = arith.constant dense<0xFF800000> : vector<8xf32>
    %90 = vector.multi_reduction <maximumf>, %89, %cst_38 [1] : vector<8x8xf32> to vector<8xf32>
    %91 = vector.shape_cast %90 : vector<8xf32> to vector<8x1xf32>
    %92 = vector.broadcast %91 : vector<8x1xf32> to vector<8x8xf32>
    %93 = arith.subf %89, %92 : vector<8x8xf32>
    %94 = math.exp %93 : vector<8x8xf32>
    %cst_39 = arith.constant dense<0.000000e+00> : vector<8xf32>
    %95 = vector.multi_reduction <add>, %94, %cst_39 [1] : vector<8x8xf32> to vector<8xf32>
    %96 = vector.shape_cast %95 : vector<8xf32> to vector<8x1xf32>
    %97 = tpu.reciprocal %96 {approx = true} : vector<8x1xf32> -> vector<8x1xf32>
    %98 = vector.broadcast %97 : vector<8x1xf32> to vector<8x8xf32>
    %99 = arith.mulf %94, %98 : vector<8x8xf32>
    %100 = arith.truncf %99 : vector<8x8xf32> to vector<8x8xbf16>
    %101 = vector.extract_strided_slice %61 {offsets = [0, 8], sizes = [8, 8], strides = [1, 1]} : vector<8x32xbf16> to vector<8x8xbf16>
    %cst_40 = arith.constant dense<0.000000e+00> : vector<8x8xf32>
    %102 = tpu.matmul %100, %101, %cst_40 {dimension_numbers = #tpu.dot_dimension_numbers<[1], [0], [0], [1], [0, 0, 1, 1], [], []>} : vector<8x8xbf16>, vector<8x8xbf16>, vector<8x8xf32> -> vector<8x8xf32>
    %c0_41 = arith.constant 0 : index
    %c8 = arith.constant 8 : index
    %103 = vector.load %arg20[%c0_41, %c8] : memref<8x32xf32, #tpu.memory_space<vmem>>, vector<8x8xf32>
    tpu.vector_store %arg20[%c0_41, %c8], %102 {strides = array<i32>} : memref<8x32xf32, #tpu.memory_space<vmem>>, vector<8x8xf32>,
    %104 = vector.extract_strided_slice %56 {offsets = [0, 16], sizes = [8, 8], strides = [1, 1]} : vector<8x32xbf16> to vector<8x8xbf16>
    %105 = vector.extract_strided_slice %59 {offsets = [16, 0], sizes = [8, 8], strides = [1, 1]} : vector<32x8xbf16> to vector<8x8xbf16>
    %cst_42 = arith.constant dense<0.000000e+00> : vector<8x8xf32>
    %106 = tpu.matmul %104, %105, %cst_42 {dimension_numbers = #tpu.dot_dimension_numbers<[1], [0], [0], [1], [0, 0, 1, 1], [], []>} : vector<8x8xbf16>, vector<8x8xbf16>, vector<8x8xf32> -> vector<8x8xf32>
    %cst_43 = arith.constant 0.353553385 : f32
    %107 = vector.broadcast %cst_43 : f32 to vector<8x8xf32>
    %108 = arith.mulf %106, %107 : vector<8x8xf32>
    %109 = vector.broadcast %9 : vector<1x8xf32> to vector<8x8xf32>
    %110 = arith.addf %108, %109 : vector<8x8xf32>
    %cst_44 = arith.constant dense<0xFF800000> : vector<8xf32>
    %111 = vector.multi_reduction <maximumf>, %110, %cst_44 [1] : vector<8x8xf32> to vector<8xf32>
    %112 = vector.shape_cast %111 : vector<8xf32> to vector<8x1xf32>
    %113 = vector.broadcast %112 : vector<8x1xf32> to vector<8x8xf32>
    %114 = arith.subf %110, %113 : vector<8x8xf32>
    %115 = math.exp %114 : vector<8x8xf32>
    %cst_45 = arith.constant dense<0.000000e+00> : vector<8xf32>
    %116 = vector.multi_reduction <add>, %115, %cst_45 [1] : vector<8x8xf32> to vector<8xf32>
    %117 = vector.shape_cast %116 : vector<8xf32> to vector<8x1xf32>
    %118 = tpu.reciprocal %117 {approx = true} : vector<8x1xf32> -> vector<8x1xf32>
    %119 = vector.broadcast %118 : vector<8x1xf32> to vector<8x8xf32>
    %120 = arith.mulf %115, %119 : vector<8x8xf32>
    %121 = arith.truncf %120 : vector<8x8xf32> to vector<8x8xbf16>
    %122 = vector.extract_strided_slice %61 {offsets = [0, 16], sizes = [8, 8], strides = [1, 1]} : vector<8x32xbf16> to vector<8x8xbf16>
    %cst_46 = arith.constant dense<0.000000e+00> : vector<8x8xf32>
    %123 = tpu.matmul %121, %122, %cst_46 {dimension_numbers = #tpu.dot_dimension_numbers<[1], [0], [0], [1], [0, 0, 1, 1], [], []>} : vector<8x8xbf16>, vector<8x8xbf16>, vector<8x8xf32> -> vector<8x8xf32>
    %c0_47 = arith.constant 0 : index
    %c16 = arith.constant 16 : index
    %124 = vector.load %arg20[%c0_47, %c16] : memref<8x32xf32, #tpu.memory_space<vmem>>, vector<8x8xf32>
    tpu.vector_store %arg20[%c0_47, %c16], %123 {strides = array<i32>} : memref<8x32xf32, #tpu.memory_space<vmem>>, vector<8x8xf32>,
    %125 = vector.extract_strided_slice %56 {offsets = [0, 24], sizes = [8, 8], strides = [1, 1]} : vector<8x32xbf16> to vector<8x8xbf16>
    %126 = vector.extract_strided_slice %59 {offsets = [24, 0], sizes = [8, 8], strides = [1, 1]} : vector<32x8xbf16> to vector<8x8xbf16>
    %cst_48 = arith.constant dense<0.000000e+00> : vector<8x8xf32>
    %127 = tpu.matmul %125, %126, %cst_48 {dimension_numbers = #tpu.dot_dimension_numbers<[1], [0], [0], [1], [0, 0, 1, 1], [], []>} : vector<8x8xbf16>, vector<8x8xbf16>, vector<8x8xf32> -> vector<8x8xf32>
    %cst_49 = arith.constant 0.353553385 : f32
    %128 = vector.broadcast %cst_49 : f32 to vector<8x8xf32>
    %129 = arith.mulf %127, %128 : vector<8x8xf32>
    %130 = vector.broadcast %9 : vector<1x8xf32> to vector<8x8xf32>
    %131 = arith.addf %129, %130 : vector<8x8xf32>
    %cst_50 = arith.constant dense<0xFF800000> : vector<8xf32>
    %132 = vector.multi_reduction <maximumf>, %131, %cst_50 [1] : vector<8x8xf32> to vector<8xf32>
    %133 = vector.shape_cast %132 : vector<8xf32> to vector<8x1xf32>
    %134 = vector.broadcast %133 : vector<8x1xf32> to vector<8x8xf32>
    %135 = arith.subf %131, %134 : vector<8x8xf32>
    %136 = math.exp %135 : vector<8x8xf32>
    %cst_51 = arith.constant dense<0.000000e+00> : vector<8xf32>
    %137 = vector.multi_reduction <add>, %136, %cst_51 [1] : vector<8x8xf32> to vector<8xf32>
    %138 = vector.shape_cast %137 : vector<8xf32> to vector<8x1xf32>
    %139 = tpu.reciprocal %138 {approx = true} : vector<8x1xf32> -> vector<8x1xf32>
    %140 = vector.broadcast %139 : vector<8x1xf32> to vector<8x8xf32>
    %141 = arith.mulf %136, %140 : vector<8x8xf32>
    %142 = arith.truncf %141 : vector<8x8xf32> to vector<8x8xbf16>
    %143 = vector.extract_strided_slice %61 {offsets = [0, 24], sizes = [8, 8], strides = [1, 1]} : vector<8x32xbf16> to vector<8x8xbf16>
    %cst_52 = arith.constant dense<0.000000e+00> : vector<8x8xf32>
    %144 = tpu.matmul %142, %143, %cst_52 {dimension_numbers = #tpu.dot_dimension_numbers<[1], [0], [0], [1], [0, 0, 1, 1], [], []>} : vector<8x8xbf16>, vector<8x8xbf16>, vector<8x8xf32> -> vector<8x8xf32>
    %c0_53 = arith.constant 0 : index
    %c24 = arith.constant 24 : index
    %145 = vector.load %arg20[%c0_53, %c24] : memref<8x32xf32, #tpu.memory_space<vmem>>, vector<8x8xf32>
    tpu.vector_store %arg20[%c0_53, %c24], %144 {strides = array<i32>} : memref<8x32xf32, #tpu.memory_space<vmem>>, vector<8x8xf32>,
    %c0_54 = arith.constant 0 : index
    %c0_55 = arith.constant 0 : index
    %146 = vector.load %arg20[%c0_54, %c0_55] : memref<8x32xf32, #tpu.memory_space<vmem>>, vector<8x32xf32>
    %147 = arith.truncf %146 : vector<8x32xf32> to vector<8x32xbf16>
    %cst_56 = arith.constant dense<0.000000e+00> : vector<8x32xf32>
    %148 = tpu.matmul %147, %15, %cst_56 {dimension_numbers = #tpu.dot_dimension_numbers<[1], [0], [0], [1], [0, 0, 1, 1], [], []>} : vector<8x32xbf16>, vector<32x32xbf16>, vector<8x32xf32> -> vector<8x32xf32>
    %c0_57 = arith.constant 0 : index
    %c0_58 = arith.constant 0 : index
    %c0_59 = arith.constant 0 : index
    %149 = vector.load %arg9[%c0_57, %c0_58, %c0_59] : memref<1x1x32xf32, #tpu.memory_space<vmem>>, vector<1x1x32xf32>
    %150 = vector.shape_cast %149 : vector<1x1x32xf32> to vector<1x32xf32>
    %151 = vector.broadcast %150 : vector<1x32xf32> to vector<8x32xf32>
    %152 = arith.addf %148, %151 : vector<8x32xf32>
    %153 = arith.addf %3, %152 : vector<8x32xf32>
    %c0_60 = arith.constant 0 : index
    %c0_61 = arith.constant 0 : index
    %c0_62 = arith.constant 0 : index
    %154 = vector.load %arg14[%c0_60, %c0_61, %c0_62] : memref<1x1x32xf32, #tpu.memory_space<vmem>>, vector<1x1x32xf32>
    %155 = vector.shape_cast %154 : vector<1x1x32xf32> to vector<1x32xf32>
    %c0_63 = arith.constant 0 : index
    %c0_64 = arith.constant 0 : index
    %c0_65 = arith.constant 0 : index
    %156 = vector.load %arg15[%c0_63, %c0_64, %c0_65] : memref<1x1x32xf32, #tpu.memory_space<vmem>>, vector<1x1x32xf32>
    %157 = vector.shape_cast %156 : vector<1x1x32xf32> to vector<1x32xf32>
    %cst_66 = arith.constant dense<0.000000e+00> : vector<8xf32>
    %158 = vector.multi_reduction <add>, %153, %cst_66 [1] : vector<8x32xf32> to vector<8xf32>
    %159 = vector.shape_cast %158 : vector<8xf32> to vector<8x1xf32>
    %cst_67 = arith.constant 3.200000e+01 : f32
    %160 = vector.broadcast %cst_67 : f32 to vector<8x1xf32>
    %161 = arith.divf %159, %160 : vector<8x1xf32>
    %162 = vector.broadcast %161 : vector<8x1xf32> to vector<8x32xf32>
    %163 = arith.subf %153, %162 : vector<8x32xf32>
    %164 = arith.mulf %163, %163 : vector<8x32xf32>
    %cst_68 = arith.constant dense<0.000000e+00> : vector<8xf32>
    %165 = vector.multi_reduction <add>, %164, %cst_68 [1] : vector<8x32xf32> to vector<8xf32>
    %166 = vector.shape_cast %165 : vector<8xf32> to vector<8x1xf32>
    %cst_69 = arith.constant 3.100000e+01 : f32
    %167 = vector.broadcast %cst_69 : f32 to vector<8x1xf32>
    %168 = arith.divf %166, %167 : vector<8x1xf32>
    %169 = math.sqrt %168 : vector<8x1xf32>
    %cst_70 = arith.constant 9.99999997E-7 : f32
    %170 = vector.broadcast %cst_70 : f32 to vector<8x1xf32>
    %171 = arith.addf %169, %170 : vector<8x1xf32>
    %172 = tpu.reciprocal %171 : vector<8x1xf32> -> vector<8x1xf32>
    %173 = vector.broadcast %161 : vector<8x1xf32> to vector<8x32xf32>
    %174 = arith.subf %153, %173 : vector<8x32xf32>
    %175 = vector.broadcast %155 : vector<1x32xf32> to vector<8x32xf32>
    %176 = arith.mulf %175, %174 : vector<8x32xf32>
    %177 = vector.broadcast %172 : vector<8x1xf32> to vector<8x32xf32>
    %178 = arith.mulf %176, %177 : vector<8x32xf32>
    %179 = vector.broadcast %157 : vector<1x32xf32> to vector<8x32xf32>
    %180 = arith.addf %178, %179 : vector<8x32xf32>
    %181 = arith.truncf %180 : vector<8x32xf32> to vector<8x32xbf16>
    %cst_71 = arith.constant dense<0.000000e+00> : vector<8x64xf32>
    %182 = tpu.matmul %181, %18, %cst_71 {dimension_numbers = #tpu.dot_dimension_numbers<[1], [0], [0], [1], [0, 0, 1, 1], [], []>} : vector<8x32xbf16>, vector<32x64xbf16>, vector<8x64xf32> -> vector<8x64xf32>
    %c0_72 = arith.constant 0 : index
    %c0_73 = arith.constant 0 : index
    %c0_74 = arith.constant 0 : index
    %183 = vector.load %arg10[%c0_72, %c0_73, %c0_74] : memref<1x1x64xf32, #tpu.memory_space<vmem>>, vector<1x1x64xf32>
    %184 = vector.shape_cast %183 : vector<1x1x64xf32> to vector<1x64xf32>
    %185 = vector.broadcast %184 : vector<1x64xf32> to vector<8x64xf32>
    %186 = arith.addf %182, %185 : vector<8x64xf32>
    %cst_75 = arith.constant 0.000000e+00 : f32
    %187 = vector.broadcast %cst_75 : f32 to vector<8x64xf32>
    %188 = arith.maximumf %186, %187 : vector<8x64xf32>
    %189 = arith.truncf %188 : vector<8x64xf32> to vector<8x64xbf16>
    %cst_76 = arith.constant dense<0.000000e+00> : vector<8x32xf32>
    %190 = tpu.matmul %189, %21, %cst_76 {dimension_numbers = #tpu.dot_dimension_numbers<[1], [0], [0], [1], [0, 0, 1, 1], [], []>} : vector<8x64xbf16>, vector<64x32xbf16>, vector<8x32xf32> -> vector<8x32xf32>
    %c0_77 = arith.constant 0 : index
    %c0_78 = arith.constant 0 : index
    %c0_79 = arith.constant 0 : index
    %191 = vector.load %arg11[%c0_77, %c0_78, %c0_79] : memref<1x1x32xf32, #tpu.memory_space<vmem>>, vector<1x1x32xf32>
    %192 = vector.shape_cast %191 : vector<1x1x32xf32> to vector<1x32xf32>
    %193 = vector.broadcast %192 : vector<1x32xf32> to vector<8x32xf32>
    %194 = arith.addf %190, %193 : vector<8x32xf32>
    %195 = arith.addf %153, %194 : vector<8x32xf32>
    %c0_80 = arith.constant 0 : index
    %c0_81 = arith.constant 0 : index
    %196 = vector.load %arg19[%c0_80, %c0_81] : memref<8x32xf32, #tpu.memory_space<vmem>>, vector<8x32xf32>
    tpu.vector_store %arg19[%c0_80, %c0_81], %195 {strides = array<i32>} : memref<8x32xf32, #tpu.memory_space<vmem>>, vector<8x32xf32>,
    %c1_i32 = arith.constant 1 : i32
    %197 = arith.cmpi eq, %arg1, %c1_i32 : i32
    %198 = arith.extui %197 : i1 to i32
    %c0_i32_82 = arith.constant 0 : i32
    %199 = arith.cmpi ne, %198, %c0_i32_82 : i32
    scf.if %199 {
      %c0_83 = arith.constant 0 : index
      %c0_84 = arith.constant 0 : index
      %200 = vector.load %arg16[%c0_83, %c0_84] : memref<1x32xf32, #tpu.memory_space<vmem>>, vector<1x32xf32>
      %c0_85 = arith.constant 0 : index
      %c0_86 = arith.constant 0 : index
      %201 = vector.load %arg17[%c0_85, %c0_86] : memref<1x32xf32, #tpu.memory_space<vmem>>, vector<1x32xf32>
      %cst_87 = arith.constant dense<0.000000e+00> : vector<8xf32>
      %202 = vector.multi_reduction <add>, %195, %cst_87 [1] : vector<8x32xf32> to vector<8xf32>
      %203 = vector.shape_cast %202 : vector<8xf32> to vector<8x1xf32>
      %cst_88 = arith.constant 3.200000e+01 : f32
      %204 = vector.broadcast %cst_88 : f32 to vector<8x1xf32>
      %205 = arith.divf %203, %204 : vector<8x1xf32>
      %206 = vector.broadcast %205 : vector<8x1xf32> to vector<8x32xf32>
      %207 = arith.subf %195, %206 : vector<8x32xf32>
      %208 = arith.mulf %207, %207 : vector<8x32xf32>
      %cst_89 = arith.constant dense<0.000000e+00> : vector<8xf32>
      %209 = vector.multi_reduction <add>, %208, %cst_89 [1] : vector<8x32xf32> to vector<8xf32>
      %210 = vector.shape_cast %209 : vector<8xf32> to vector<8x1xf32>
      %cst_90 = arith.constant 3.100000e+01 : f32
      %211 = vector.broadcast %cst_90 : f32 to vector<8x1xf32>
      %212 = arith.divf %210, %211 : vector<8x1xf32>
      %213 = math.sqrt %212 : vector<8x1xf32>
      %cst_91 = arith.constant 9.99999997E-7 : f32
      %214 = vector.broadcast %cst_91 : f32 to vector<8x1xf32>
      %215 = arith.addf %213, %214 : vector<8x1xf32>
      %216 = tpu.reciprocal %215 : vector<8x1xf32> -> vector<8x1xf32>
      %217 = vector.broadcast %205 : vector<8x1xf32> to vector<8x32xf32>
      %218 = arith.subf %195, %217 : vector<8x32xf32>
      %219 = vector.broadcast %200 : vector<1x32xf32> to vector<8x32xf32>
      %220 = arith.mulf %219, %218 : vector<8x32xf32>
      %221 = vector.broadcast %216 : vector<8x1xf32> to vector<8x32xf32>
      %222 = arith.mulf %220, %221 : vector<8x32xf32>
      %223 = vector.broadcast %201 : vector<1x32xf32> to vector<8x32xf32>
      %224 = arith.addf %222, %223 : vector<8x32xf32>
      %c0_92 = arith.constant 0 : index
      %c0_93 = arith.constant 0 : index
      %c0_94 = arith.constant 0 : index
      %225 = vector.load %arg18[%c0_92, %c0_93, %c0_94] : memref<1x8x32xf32, #tpu.memory_space<vmem>>, vector<1x8x32xf32>
      %226 = vector.shape_cast %225 : vector<1x8x32xf32> to vector<8x32xf32>
      %227 = vector.shape_cast %224 : vector<8x32xf32> to vector<1x8x32xf32>
      tpu.vector_store %arg18[%c0_92, %c0_93, %c0_94], %227 {strides = array<i32>} : memref<1x8x32xf32, #tpu.memory_space<vmem>>, vector<1x8x32xf32>,
    } else {
    }
    return
  }
  func.func @transform_0(%arg0: i32, %arg1: i32) -> (i32, i32, i32) {
    %c0_i32 = arith.constant 0 : i32
    %c0_i32_0 = arith.constant 0 : i32
    %c0_i32_1 = arith.constant 0 : i32
    return %arg0, %c0_i32, %c0_i32_0 : i32, i32, i32
  }
  func.func @transform_1(%arg0: i32, %arg1: i32) -> (i32, i32, i32) {
    %c0_i32 = arith.constant 0 : i32
    %c0_i32_0 = arith.constant 0 : i32
    %c0_i32_1 = arith.constant 0 : i32
    return %arg0, %c0_i32, %c0_i32_0 : i32, i32, i32
  }
  func.func @transform_2(%arg0: i32, %arg1: i32) -> (i32, i32, i32) {
    %c0_i32 = arith.constant 0 : i32
    %c0_i32_0 = arith.constant 0 : i32
    %c0_i32_1 = arith.constant 0 : i32
    %c0_i32_2 = arith.constant 0 : i32
    return %c0_i32, %c0_i32_0, %c0_i32_1 : i32, i32, i32
  }
  func.func @transform_3(%arg0: i32, %arg1: i32) -> (i32, i32, i32) {
    %c0_i32 = arith.constant 0 : i32
    %c0_i32_0 = arith.constant 0 : i32
    %c0_i32_1 = arith.constant 0 : i32
    %c0_i32_2 = arith.constant 0 : i32
    return %c0_i32, %c0_i32_0, %c0_i32_1 : i32, i32, i32
  }
  func.func @transform_4(%arg0: i32, %arg1: i32) -> (i32, i32, i32) {
    %c0_i32 = arith.constant 0 : i32
    %c0_i32_0 = arith.constant 0 : i32
    %c0_i32_1 = arith.constant 0 : i32
    %c0_i32_2 = arith.constant 0 : i32
    return %c0_i32, %c0_i32_0, %c0_i32_1 : i32, i32, i32
  }
  func.func @transform_5(%arg0: i32, %arg1: i32) -> (i32, i32, i32) {
    %c0_i32 = arith.constant 0 : i32
    %c0_i32_0 = arith.constant 0 : i32
    %c0_i32_1 = arith.constant 0 : i32
    %c0_i32_2 = arith.constant 0 : i32
    return %c0_i32, %c0_i32_0, %c0_i32_1 : i32, i32, i32
  }
  func.func @transform_6(%arg0: i32, %arg1: i32) -> (i32, i32, i32) {
    %c0_i32 = arith.constant 0 : i32
    %c0_i32_0 = arith.constant 0 : i32
    %c0_i32_1 = arith.constant 0 : i32
    return %arg1, %c0_i32, %c0_i32_0 : i32, i32, i32
  }
  func.func @transform_7(%arg0: i32, %arg1: i32) -> (i32, i32, i32) {
    %c0_i32 = arith.constant 0 : i32
    %c0_i32_0 = arith.constant 0 : i32
    %c0_i32_1 = arith.constant 0 : i32
    return %arg1, %c0_i32, %c0_i32_0 : i32, i32, i32
  }
  func.func @transform_8(%arg0: i32, %arg1: i32) -> (i32, i32, i32) {
    %c0_i32 = arith.constant 0 : i32
    %c0_i32_0 = arith.constant 0 : i32
    %c0_i32_1 = arith.constant 0 : i32
    return %arg1, %c0_i32, %c0_i32_0 : i32, i32, i32
  }
  func.func @transform_9(%arg0: i32, %arg1: i32) -> (i32, i32, i32) {
    %c0_i32 = arith.constant 0 : i32
    %c0_i32_0 = arith.constant 0 : i32
    %c0_i32_1 = arith.constant 0 : i32
    return %arg1, %c0_i32, %c0_i32_0 : i32, i32, i32
  }
  func.func @transform_10(%arg0: i32, %arg1: i32) -> (i32, i32, i32) {
    %c0_i32 = arith.constant 0 : i32
    %c0_i32_0 = arith.constant 0 : i32
    %c0_i32_1 = arith.constant 0 : i32
    return %arg1, %c0_i32, %c0_i32_0 : i32, i32, i32
  }
  func.func @transform_11(%arg0: i32, %arg1: i32) -> (i32, i32, i32) {
    %c0_i32 = arith.constant 0 : i32
    %c0_i32_0 = arith.constant 0 : i32
    %c0_i32_1 = arith.constant 0 : i32
    return %arg1, %c0_i32, %c0_i32_0 : i32, i32, i32
  }
  func.func @transform_12(%arg0: i32, %arg1: i32) -> (i32, i32, i32) {
    %c0_i32 = arith.constant 0 : i32
    %c0_i32_0 = arith.constant 0 : i32
    %c0_i32_1 = arith.constant 0 : i32
    return %arg1, %c0_i32, %c0_i32_0 : i32, i32, i32
  }
  func.func @transform_13(%arg0: i32, %arg1: i32) -> (i32, i32, i32) {
    %c0_i32 = arith.constant 0 : i32
    %c0_i32_0 = arith.constant 0 : i32
    %c0_i32_1 = arith.constant 0 : i32
    return %arg1, %c0_i32, %c0_i32_0 : i32, i32, i32
  }
  func.func @transform_14(%arg0: i32, %arg1: i32) -> (i32, i32) {
    %c0_i32 = arith.constant 0 : i32
    %c0_i32_0 = arith.constant 0 : i32
    %c0_i32_1 = arith.constant 0 : i32
    return %c0_i32, %c0_i32_0 : i32, i32
  }
  func.func @transform_15(%arg0: i32, %arg1: i32) -> (i32, i32) {
    %c0_i32 = arith.constant 0 : i32
    %c0_i32_0 = arith.constant 0 : i32
    %c0_i32_1 = arith.constant 0 : i32
    return %c0_i32, %c0_i32_0 : i32, i32
  }
  func.func @transform_16(%arg0: i32, %arg1: i32) -> (i32, i32, i32) {
    %c0_i32 = arith.constant 0 : i32
    %c0_i32_0 = arith.constant 0 : i32
    %c0_i32_1 = arith.constant 0 : i32
    return %arg0, %c0_i32, %c0_i32_0 : i32, i32, i32
  }
}

</mosaic_0001>

<llo_original>
// kernel: tpu_custom_call.1
$region0: #{tpu_custom_call.1}
  #allocation0 [shape = 'u32[]', space=smem, size = 0x4, offset = 0x4, fixed_abs, tag = 'smem constant byte address 0x4 - core index']
  #allocation1 [shape = 'u32[144,128]{1,0:T(1,128)}', space=vmem, size = 0x12000, scoped, tag = 'internal scratch']
  #allocation2 [shape = 'f32[8,32]{1,0:T(8,128)}', space=vmem, size = 0x1000, scoped, tag = 'scratch operand']
  #allocation3 [shape = 'f32[8,32]{1,0:T(8,128)}', space=vmem, size = 0x1000, scoped, tag = 'scratch operand']
  %s0 = inlined_call_operand.hbm [shape: f32[2,8,32], index: 0, kind: input, shape index: {}]
  %s1 = inlined_call_operand.vmem [shape: f32[2,1,8], index: 1, kind: input, shape index: {}]
  %s2 = inlined_call_operand.vmem [shape: bf16[2,32,96], index: 2, kind: input, shape index: {}]
  %s3 = inlined_call_operand.vmem [shape: bf16[2,32,32], index: 3, kind: input, shape index: {}]
  %s4 = inlined_call_operand.vmem [shape: bf16[2,32,64], index: 4, kind: input, shape index: {}]
  %s5 = inlined_call_operand.vmem [shape: bf16[2,64,32], index: 5, kind: input, shape index: {}]
  %s6 = inlined_call_operand.vmem [shape: f32[2,1,96], index: 6, kind: input, shape index: {}]
  %s7 = inlined_call_operand.vmem [shape: f32[2,1,32], index: 7, kind: input, shape index: {}]
  %s8 = inlined_call_operand.vmem [shape: f32[2,1,64], index: 8, kind: input, shape index: {}]
  %s9 = inlined_call_operand.vmem [shape: f32[2,1,32], index: 9, kind: input, shape index: {}]
  %s10 = inlined_call_operand.vmem [shape: f32[2,1,32], index: 10, kind: input, shape index: {}]
  %s11 = inlined_call_operand.vmem [shape: f32[2,1,32], index: 11, kind: input, shape index: {}]
  %s12 = inlined_call_operand.vmem [shape: f32[2,1,32], index: 12, kind: input, shape index: {}]
  %s13 = inlined_call_operand.vmem [shape: f32[2,1,32], index: 13, kind: input, shape index: {}]
  %s14 = inlined_call_operand.vmem [shape: f32[1,32], index: 14, kind: input, shape index: {}]
  %s15 = inlined_call_operand.vmem [shape: f32[1,32], index: 15, kind: input, shape index: {}]
  %s16 = inlined_call_operand.hbm [shape: f32[2,8,32], index: 16, kind: output, shape index: {}]
  %s17 = sld [smem:[#allocation0]]
  $region109: #{tpu_custom_call.1} parent=0
    _
  %s19 = ssub.s32 1, %s17
  %s20 = scalar_select 0, %s19, %s17
  $region1: #{tpu_custom_call.1} parent=0
    #allocation4 [shape = 'u8[8192]{0}', space=vmem, size = 0x2000, scoped, tag = 'input window, operand 0']
    #allocation5 [shape = 's32[2]{0}', space=sflag, size = 0x8, scoped, tag = 'scoped memory for tpu_custom_call.1']
    #allocation6 [shape = 's32[2]{0}', space=sflag, size = 0x8, scoped, tag = 'scoped memory for tpu_custom_call.1']
    #allocation7 [shape = 'u8[8192]{0}', space=vmem, size = 0x2000, scoped, tag = 'output window, operand 0']
    %21 = vsyncpa [#allocation5], 0
    %s22 = scalar_lea.sflag [#allocation5], 1
    %23 = vsyncpa %s22, 0
    %24 = vsyncpa [#allocation6], 0
    %s25 = scalar_lea.sflag [#allocation6], 1
    %26 = vsyncpa %s25, 0
    loop: start=0, step=1, limit=6
    $region2: #{tpu_custom_call.1} parent=1 // loop_pre_header
      _
    $region3: #{tpu_custom_call.1} parent=1 // loop_header
      %s28 = sphi 0, %s32
      %p29 = scmp.ge.s32.totalorder %s28, 6
      %s35 = sphi 0, %s47
      %s36 = sphi 0, %s43
      %s37 = sphi 0, %s35
      %s38 = sphi 0, %s36
      %s39 = sphi 0, %s37
      %s40 = sphi 0, %s38
      %s50 = sphi 0, %s52
      %s53 = sphi 0, %s50
      %s54 = sphi 0, %s53
      %s70 = sphi 0, %s54
      %s76 = sphi 0, %s78
      %s79 = sphi 0, %s76
      %s80 = sphi 0, %s79
      %s96 = sphi 0, %s80
      %s100 = sphi 0, %s100
      %s102 = sphi 0, %s100
      %s103 = sphi 0, %s102
      %s117 = sphi 0, %s103
      %s121 = sphi 0, %s121
      %s123 = sphi 0, %s121
      %s124 = sphi 0, %s123
      %s138 = sphi 0, %s124
      %s142 = sphi 0, %s142
      %s144 = sphi 0, %s142
      %s145 = sphi 0, %s144
      %s159 = sphi 0, %s145
      %s163 = sphi 0, %s163
      %s165 = sphi 0, %s163
      %s166 = sphi 0, %s165
      %s180 = sphi 0, %s166
      %s186 = sphi 0, %s188
      %s189 = sphi 0, %s186
      %s190 = sphi 0, %s189
      %s206 = sphi 0, %s190
      %s212 = sphi 0, %s214
      %s215 = sphi 0, %s212
      %s216 = sphi 0, %s215
      %s232 = sphi 0, %s216
      %s238 = sphi 0, %s240
      %s241 = sphi 0, %s238
      %s242 = sphi 0, %s241
      %s258 = sphi 0, %s242
      %s264 = sphi 0, %s266
      %s267 = sphi 0, %s264
      %s268 = sphi 0, %s267
      %s284 = sphi 0, %s268
      %s290 = sphi 0, %s292
      %s293 = sphi 0, %s290
      %s294 = sphi 0, %s293
      %s310 = sphi 0, %s294
      %s316 = sphi 0, %s318
      %s319 = sphi 0, %s316
      %s320 = sphi 0, %s319
      %s336 = sphi 0, %s320
      %s342 = sphi 0, %s344
      %s345 = sphi 0, %s342
      %s346 = sphi 0, %s345
      %s362 = sphi 0, %s346
      %s368 = sphi 0, %s370
      %s371 = sphi 0, %s368
      %s372 = sphi 0, %s371
      %s388 = sphi 0, %s372
      %s392 = sphi 0, %s392
      %s394 = sphi 0, %s392
      %s395 = sphi 0, %s394
      %s409 = sphi 0, %s395
      %s413 = sphi 0, %s413
      %s415 = sphi 0, %s413
      %s416 = sphi 0, %s415
      %s430 = sphi 0, %s416
      %s436 = sphi 0, %s438
      %s439 = sphi 0, %s436
      %s440 = sphi 0, %s439
      %s456 = sphi 0, %s440
    $region4: #{tpu_custom_call.1} parent=1 // loop_header_branch
      %31 = sbr.rel (%p29) target = $region8
    $region5: #{tpu_custom_call.1} parent=1 // loop_body
      %s33 = ssub.s32 %s28, 1
      %s34 = ssub.s32 %s28, 2
      %s41 = sadd.s32 1, %s36
      %p42 = scmp.ge.s32.totalorder %s41, 2
      %s43 = scalar_select %p42, 0, %s41
      %s44 = sadd.s32 1, %s35
      %s45 = scalar_select %p42, %s44, %s35
      %p46 = scmp.ge.s32.totalorder %s45, 2
      %s47 = scalar_select %p46, 0, %s45
      %s48 = ssub.s32 %s35, %s47
      %p49 = scmp.eq.s32.totalorder %s48, 0
      %s51 = sadd.s32 %s50, 1
      %s52 = scalar_select %p49, %s50, %s51
      %p55 = pneg %p49
      %p56 = scmp.eq.s32.totalorder %s28, 3
      %p57 = por %p55, %p56
      %p58 = scmp.ne.s32.totalorder %s50, %s53
      %p59 = scmp.eq.s32.totalorder %s28, 0
      %p60 = por %p58, %p59
      %p61 = scmp.ne.s32.totalorder %s50, %s53
      %p62 = scmp.eq.s32.totalorder %s33, 3
      %p63 = por %p61, %p62
      %p64 = scmp.ne.s32.totalorder %s53, %s54
      %p65 = scmp.eq.s32.totalorder %s33, 0
      %p66 = por %p64, %p65
      %p67 = scmp.ne.s32.totalorder %s53, %s54
      %p68 = scmp.eq.s32.totalorder %s34, 3
      %p69 = por %p67, %p68
      %p71 = scmp.ne.s32.totalorder %s54, %s70
      %p72 = scmp.eq.s32.totalorder %s34, 0
      %p73 = por %p71, %p72
      %s74 = ssub.s32 %s35, %s47
      %p75 = scmp.eq.s32.totalorder %s74, 0
      %s77 = sadd.s32 %s76, 1
      %s78 = scalar_select %p75, %s76, %s77
      %p81 = pneg %p75
      %p82 = scmp.eq.s32.totalorder %s28, 3
      %p83 = por %p81, %p82
      %p84 = scmp.ne.s32.totalorder %s76, %s79
      %p85 = scmp.eq.s32.totalorder %s28, 0
      %p86 = por %p84, %p85
      %p87 = scmp.ne.s32.totalorder %s76, %s79
      %p88 = scmp.eq.s32.totalorder %s33, 3
      %p89 = por %p87, %p88
      %p90 = scmp.ne.s32.totalorder %s79, %s80
      %p91 = scmp.eq.s32.totalorder %s33, 0
      %p92 = por %p90, %p91
      %p93 = scmp.ne.s32.totalorder %s79, %s80
      %p94 = scmp.eq.s32.totalorder %s34, 3
      %p95 = por %p93, %p94
      %p97 = scmp.ne.s32.totalorder %s80, %s96
      %p98 = scmp.eq.s32.totalorder %s34, 0
      %p99 = por %p97, %p98
      %s101 = sadd.s32 %s100, 1
      %p104 = scmp.eq.s32.totalorder %s28, 3
      %p105 = scmp.ne.s32.totalorder %s100, %s102
      %p106 = scmp.eq.s32.totalorder %s28, 0
      %p107 = por %p105, %p106
      %p108 = scmp.ne.s32.totalorder %s100, %s102
      %p109 = scmp.eq.s32.totalorder %s33, 3
      %p110 = por %p108, %p109
      %p111 = scmp.ne.s32.totalorder %s102, %s103
      %p112 = scmp.eq.s32.totalorder %s33, 0
      %p113 = por %p111, %p112
      %p114 = scmp.ne.s32.totalorder %s102, %s103
      %p115 = scmp.eq.s32.totalorder %s34, 3
      %p116 = por %p114, %p115
      %p118 = scmp.ne.s32.totalorder %s103, %s117
      %p119 = scmp.eq.s32.totalorder %s34, 0
      %p120 = por %p118, %p119
      %s122 = sadd.s32 %s121, 1
      %p125 = scmp.eq.s32.totalorder %s28, 3
      %p126 = scmp.ne.s32.totalorder %s121, %s123
      %p127 = scmp.eq.s32.totalorder %s28, 0
      %p128 = por %p126, %p127
      %p129 = scmp.ne.s32.totalorder %s121, %s123
      %p130 = scmp.eq.s32.totalorder %s33, 3
      %p131 = por %p129, %p130
      %p132 = scmp.ne.s32.totalorder %s123, %s124
      %p133 = scmp.eq.s32.totalorder %s33, 0
      %p134 = por %p132, %p133
      %p135 = scmp.ne.s32.totalorder %s123, %s124
      %p136 = scmp.eq.s32.totalorder %s34, 3
      %p137 = por %p135, %p136
      %p139 = scmp.ne.s32.totalorder %s124, %s138
      %p140 = scmp.eq.s32.totalorder %s34, 0
      %p141 = por %p139, %p140
      %s143 = sadd.s32 %s142, 1
      %p146 = scmp.eq.s32.totalorder %s28, 3
      %p147 = scmp.ne.s32.totalorder %s142, %s144
      %p148 = scmp.eq.s32.totalorder %s28, 0
      %p149 = por %p147, %p148
      %p150 = scmp.ne.s32.totalorder %s142, %s144
      %p151 = scmp.eq.s32.totalorder %s33, 3
      %p152 = por %p150, %p151
      %p153 = scmp.ne.s32.totalorder %s144, %s145
      %p154 = scmp.eq.s32.totalorder %s33, 0
      %p155 = por %p153, %p154
      %p156 = scmp.ne.s32.totalorder %s144, %s145
      %p157 = scmp.eq.s32.totalorder %s34, 3
      %p158 = por %p156, %p157
      %p160 = scmp.ne.s32.totalorder %s145, %s159
      %p161 = scmp.eq.s32.totalorder %s34, 0
      %p162 = por %p160, %p161
      %s164 = sadd.s32 %s163, 1
      %p167 = scmp.eq.s32.totalorder %s28, 3
      %p168 = scmp.ne.s32.totalorder %s163, %s165
      %p169 = scmp.eq.s32.totalorder %s28, 0
      %p170 = por %p168, %p169
      %p171 = scmp.ne.s32.totalorder %s163, %s165
      %p172 = scmp.eq.s32.totalorder %s33, 3
      %p173 = por %p171, %p172
      %p174 = scmp.ne.s32.totalorder %s165, %s166
      %p175 = scmp.eq.s32.totalorder %s33, 0
      %p176 = por %p174, %p175
      %p177 = scmp.ne.s32.totalorder %s165, %s166
      %p178 = scmp.eq.s32.totalorder %s34, 3
      %p179 = por %p177, %p178
      %p181 = scmp.ne.s32.totalorder %s166, %s180
      %p182 = scmp.eq.s32.totalorder %s34, 0
      %p183 = por %p181, %p182
      %s184 = ssub.s32 %s36, %s43
      %p185 = scmp.eq.s32.totalorder %s184, 0
      %s187 = sadd.s32 %s186, 1
      %s188 = scalar_select %p185, %s186, %s187
      %p191 = pneg %p185
      %p192 = scmp.eq.s32.totalorder %s28, 3
      %p193 = por %p191, %p192
      %p194 = scmp.ne.s32.totalorder %s186, %s189
      %p195 = scmp.eq.s32.totalorder %s28, 0
      %p196 = por %p194, %p195
      %p197 = scmp.ne.s32.totalorder %s186, %s189
      %p198 = scmp.eq.s32.totalorder %s33, 3
      %p199 = por %p197, %p198
      %p200 = scmp.ne.s32.totalorder %s189, %s190
      %p201 = scmp.eq.s32.totalorder %s33, 0
      %p202 = por %p200, %p201
      %p203 = scmp.ne.s32.totalorder %s189, %s190
      %p204 = scmp.eq.s32.totalorder %s34, 3
      %p205 = por %p203, %p204
      %p207 = scmp.ne.s32.totalorder %s190, %s206
      %p208 = scmp.eq.s32.totalorder %s34, 0
      %p209 = por %p207, %p208
      %s210 = ssub.s32 %s36, %s43
      %p211 = scmp.eq.s32.totalorder %s210, 0
      %s213 = sadd.s32 %s212, 1
      %s214 = scalar_select %p211, %s212, %s213
      %p217 = pneg %p211
      %p218 = scmp.eq.s32.totalorder %s28, 3
      %p219 = por %p217, %p218
      %p220 = scmp.ne.s32.totalorder %s212, %s215
      %p221 = scmp.eq.s32.totalorder %s28, 0
      %p222 = por %p220, %p221
      %p223 = scmp.ne.s32.totalorder %s212, %s215
      %p224 = scmp.eq.s32.totalorder %s33, 3
      %p225 = por %p223, %p224
      %p226 = scmp.ne.s32.totalorder %s215, %s216
      %p227 = scmp.eq.s32.totalorder %s33, 0
      %p228 = por %p226, %p227
      %p229 = scmp.ne.s32.totalorder %s215, %s216
      %p230 = scmp.eq.s32.totalorder %s34, 3
      %p231 = por %p229, %p230
      %p233 = scmp.ne.s32.totalorder %s216, %s232
      %p234 = scmp.eq.s32.totalorder %s34, 0
      %p235 = por %p233, %p234
      %s236 = ssub.s32 %s36, %s43
      %p237 = scmp.eq.s32.totalorder %s236, 0
      %s239 = sadd.s32 %s238, 1
      %s240 = scalar_select %p237, %s238, %s239
      %p243 = pneg %p237
      %p244 = scmp.eq.s32.totalorder %s28, 3
      %p245 = por %p243, %p244
      %p246 = scmp.ne.s32.totalorder %s238, %s241
      %p247 = scmp.eq.s32.totalorder %s28, 0
      %p248 = por %p246, %p247
      %p249 = scmp.ne.s32.totalorder %s238, %s241
      %p250 = scmp.eq.s32.totalorder %s33, 3
      %p251 = por %p249, %p250
      %p252 = scmp.ne.s32.totalorder %s241, %s242
      %p253 = scmp.eq.s32.totalorder %s33, 0
      %p254 = por %p252, %p253
      %p255 = scmp.ne.s32.totalorder %s241, %s242
      %p256 = scmp.eq.s32.totalorder %s34, 3
      %p257 = por %p255, %p256
      %p259 = scmp.ne.s32.totalorder %s242, %s258
      %p260 = scmp.eq.s32.totalorder %s34, 0
      %p261 = por %p259, %p260
      %s262 = ssub.s32 %s36, %s43
      %p263 = scmp.eq.s32.totalorder %s262, 0
      %s265 = sadd.s32 %s264, 1
      %s266 = scalar_select %p263, %s264, %s265
      %p269 = pneg %p263
      %p270 = scmp.eq.s32.totalorder %s28, 3
      %p271 = por %p269, %p270
      %p272 = scmp.ne.s32.totalorder %s264, %s267
      %p273 = scmp.eq.s32.totalorder %s28, 0
      %p274 = por %p272, %p273
      %p275 = scmp.ne.s32.totalorder %s264, %s267
      %p276 = scmp.eq.s32.totalorder %s33, 3
      %p277 = por %p275, %p276
      %p278 = scmp.ne.s32.totalorder %s267, %s268
      %p279 = scmp.eq.s32.totalorder %s33, 0
      %p280 = por %p278, %p279
      %p281 = scmp.ne.s32.totalorder %s267, %s268
      %p282 = scmp.eq.s32.totalorder %s34, 3
      %p283 = por %p281, %p282
      %p285 = scmp.ne.s32.totalorder %s268, %s284
      %p286 = scmp.eq.s32.totalorder %s34, 0
      %p287 = por %p285, %p286
      %s288 = ssub.s32 %s36, %s43
      %p289 = scmp.eq.s32.totalorder %s288, 0
      %s291 = sadd.s32 %s290, 1
      %s292 = scalar_select %p289, %s290, %s291
      %p295 = pneg %p289
      %p296 = scmp.eq.s32.totalorder %s28, 3
      %p297 = por %p295, %p296
      %p298 = scmp.ne.s32.totalorder %s290, %s293
      %p299 = scmp.eq.s32.totalorder %s28, 0
      %p300 = por %p298, %p299
      %p301 = scmp.ne.s32.totalorder %s290, %s293
      %p302 = scmp.eq.s32.totalorder %s33, 3
      %p303 = por %p301, %p302
      %p304 = scmp.ne.s32.totalorder %s293, %s294
      %p305 = scmp.eq.s32.totalorder %s33, 0
      %p306 = por %p304, %p305
      %p307 = scmp.ne.s32.totalorder %s293, %s294
      %p308 = scmp.eq.s32.totalorder %s34, 3
      %p309 = por %p307, %p308
      %p311 = scmp.ne.s32.totalorder %s294, %s310
      %p312 = scmp.eq.s32.totalorder %s34, 0
      %p313 = por %p311, %p312
      %s314 = ssub.s32 %s36, %s43
      %p315 = scmp.eq.s32.totalorder %s314, 0
      %s317 = sadd.s32 %s316, 1
      %s318 = scalar_select %p315, %s316, %s317
      %p321 = pneg %p315
      %p322 = scmp.eq.s32.totalorder %s28, 3
      %p323 = por %p321, %p322
      %p324 = scmp.ne.s32.totalorder %s316, %s319
      %p325 = scmp.eq.s32.totalorder %s28, 0
      %p326 = por %p324, %p325
      %p327 = scmp.ne.s32.totalorder %s316, %s319
      %p328 = scmp.eq.s32.totalorder %s33, 3
      %p329 = por %p327, %p328
      %p330 = scmp.ne.s32.totalorder %s319, %s320
      %p331 = scmp.eq.s32.totalorder %s33, 0
      %p332 = por %p330, %p331
      %p333 = scmp.ne.s32.totalorder %s319, %s320
      %p334 = scmp.eq.s32.totalorder %s34, 3
      %p335 = por %p333, %p334
      %p337 = scmp.ne.s32.totalorder %s320, %s336
      %p338 = scmp.eq.s32.totalorder %s34, 0
      %p339 = por %p337, %p338
      %s340 = ssub.s32 %s36, %s43
      %p341 = scmp.eq.s32.totalorder %s340, 0
      %s343 = sadd.s32 %s342, 1
      %s344 = scalar_select %p341, %s342, %s343
      %p347 = pneg %p341
      %p348 = scmp.eq.s32.totalorder %s28, 3
      %p349 = por %p347, %p348
      %p350 = scmp.ne.s32.totalorder %s342, %s345
      %p351 = scmp.eq.s32.totalorder %s28, 0
      %p352 = por %p350, %p351
      %p353 = scmp.ne.s32.totalorder %s342, %s345
      %p354 = scmp.eq.s32.totalorder %s33, 3
      %p355 = por %p353, %p354
      %p356 = scmp.ne.s32.totalorder %s345, %s346
      %p357 = scmp.eq.s32.totalorder %s33, 0
      %p358 = por %p356, %p357
      %p359 = scmp.ne.s32.totalorder %s345, %s346
      %p360 = scmp.eq.s32.totalorder %s34, 3
      %p361 = por %p359, %p360
      %p363 = scmp.ne.s32.totalorder %s346, %s362
      %p364 = scmp.eq.s32.totalorder %s34, 0
      %p365 = por %p363, %p364
      %s366 = ssub.s32 %s36, %s43
      %p367 = scmp.eq.s32.totalorder %s366, 0
      %s369 = sadd.s32 %s368, 1
      %s370 = scalar_select %p367, %s368, %s369
      %p373 = pneg %p367
      %p374 = scmp.eq.s32.totalorder %s28, 3
      %p375 = por %p373, %p374
      %p376 = scmp.ne.s32.totalorder %s368, %s371
      %p377 = scmp.eq.s32.totalorder %s28, 0
      %p378 = por %p376, %p377
      %p379 = scmp.ne.s32.totalorder %s368, %s371
      %p380 = scmp.eq.s32.totalorder %s33, 3
      %p381 = por %p379, %p380
      %p382 = scmp.ne.s32.totalorder %s371, %s372
      %p383 = scmp.eq.s32.totalorder %s33, 0
      %p384 = por %p382, %p383
      %p385 = scmp.ne.s32.totalorder %s371, %s372
      %p386 = scmp.eq.s32.totalorder %s34, 3
      %p387 = por %p385, %p386
      %p389 = scmp.ne.s32.totalorder %s372, %s388
      %p390 = scmp.eq.s32.totalorder %s34, 0
      %p391 = por %p389, %p390
      %s393 = sadd.s32 %s392, 1
      %p396 = scmp.eq.s32.totalorder %s28, 3
      %p397 = scmp.ne.s32.totalorder %s392, %s394
      %p398 = scmp.eq.s32.totalorder %s28, 0
      %p399 = por %p397, %p398
      %p400 = scmp.ne.s32.totalorder %s392, %s394
      %p401 = scmp.eq.s32.totalorder %s33, 3
      %p402 = por %p400, %p401
      %p403 = scmp.ne.s32.totalorder %s394, %s395
      %p404 = scmp.eq.s32.totalorder %s33, 0
      %p405 = por %p403, %p404
      %p406 = scmp.ne.s32.totalorder %s394, %s395
      %p407 = scmp.eq.s32.totalorder %s34, 3
      %p408 = por %p406, %p407
      %p410 = scmp.ne.s32.totalorder %s395, %s409
      %p411 = scmp.eq.s32.totalorder %s34, 0
      %p412 = por %p410, %p411
      %s414 = sadd.s32 %s413, 1
      %p417 = scmp.eq.s32.totalorder %s28, 3
      %p418 = scmp.ne.s32.totalorder %s413, %s415
      %p419 = scmp.eq.s32.totalorder %s28, 0
      %p420 = por %p418, %p419
      %p421 = scmp.ne.s32.totalorder %s413, %s415
      %p422 = scmp.eq.s32.totalorder %s33, 3
      %p423 = por %p421, %p422
      %p424 = scmp.ne.s32.totalorder %s415, %s416
      %p425 = scmp.eq.s32.totalorder %s33, 0
      %p426 = por %p424, %p425
      %p427 = scmp.ne.s32.totalorder %s415, %s416
      %p428 = scmp.eq.s32.totalorder %s34, 3
      %p429 = por %p427, %p428
      %p431 = scmp.ne.s32.totalorder %s416, %s430
      %p432 = scmp.eq.s32.totalorder %s34, 0
      %p433 = por %p431, %p432
      %s434 = ssub.s32 %s35, %s47
      %p435 = scmp.eq.s32.totalorder %s434, 0
      %s437 = sadd.s32 %s436, 1
      %s438 = scalar_select %p435, %s436, %s437
      %p441 = pneg %p435
      %p442 = scmp.eq.s32.totalorder %s28, 3
      %p443 = por %p441, %p442
      %p444 = scmp.ne.s32.totalorder %s436, %s439
      %p445 = scmp.eq.s32.totalorder %s28, 0
      %p446 = por %p444, %p445
      %p447 = scmp.ne.s32.totalorder %s436, %s439
      %p448 = scmp.eq.s32.totalorder %s33, 3
      %p449 = por %p447, %p448
      %p450 = scmp.ne.s32.totalorder %s439, %s440
      %p451 = scmp.eq.s32.totalorder %s33, 0
      %p452 = por %p450, %p451
      %p453 = scmp.ne.s32.totalorder %s439, %s440
      %p454 = scmp.eq.s32.totalorder %s34, 3
      %p455 = por %p453, %p454
      %p457 = scmp.ne.s32.totalorder %s440, %s456
      %p458 = scmp.eq.s32.totalorder %s34, 0
      %p459 = por %p457, %p458
      %p460 = scmp.le.s32.totalorder 1, %s28
      %p461 = scmp.lt.s32.totalorder %s28, 5
      %p462 = pnand %p460, %p461
      %p463 = pneg %p462
      // Predicated region
      $region9: #{tpu_custom_call.1} parent=5 // pred_check
        _
      $region10: #{tpu_custom_call.1} parent=5 // pred_check_branch
        %465 = sbr.rel (%p462) target = $region12
      $region11: #{tpu_custom_call.1} parent=5 // pred_region
        %s466 = ssub.s32 %s28, 1
        // Predicated region
        $region13: #{tpu_custom_call.1} parent=11 // pred_check
          %p467 = pneg %p113
        $region14: #{tpu_custom_call.1} parent=11 // pred_check_branch
          %469 = sbr.rel (%p467) target = $region16
        $region15: #{tpu_custom_call.1} parent=11 // pred_region
          _
        $region16: #{tpu_custom_call.1} parent=11 // pred_fallthru
          _
        // Predicated region
        $region17: #{tpu_custom_call.1} parent=11 // pred_check
          %p470 = pneg %p134
        $region18: #{tpu_custom_call.1} parent=11 // pred_check_branch
          %472 = sbr.rel (%p470) target = $region20
        $region19: #{tpu_custom_call.1} parent=11 // pred_region
          _
        $region20: #{tpu_custom_call.1} parent=11 // pred_fallthru
          _
        // Predicated region
        $region21: #{tpu_custom_call.1} parent=11 // pred_check
          %p473 = pneg %p155
        $region22: #{tpu_custom_call.1} parent=11 // pred_check_branch
          %475 = sbr.rel (%p473) target = $region24
        $region23: #{tpu_custom_call.1} parent=11 // pred_region
          _
        $region24: #{tpu_custom_call.1} parent=11 // pred_fallthru
          _
        // Predicated region
        $region25: #{tpu_custom_call.1} parent=11 // pred_check
          %p476 = pneg %p176
        $region26: #{tpu_custom_call.1} parent=11 // pred_check_branch
          %478 = sbr.rel (%p476) target = $region28
        $region27: #{tpu_custom_call.1} parent=11 // pred_region
          _
        $region28: #{tpu_custom_call.1} parent=11 // pred_fallthru
          _
        // Predicated region
        $region29: #{tpu_custom_call.1} parent=11 // pred_check
          %p479 = pneg %p405
        $region30: #{tpu_custom_call.1} parent=11 // pred_check_branch
          %481 = sbr.rel (%p479) target = $region32
        $region31: #{tpu_custom_call.1} parent=11 // pred_region
          _
        $region32: #{tpu_custom_call.1} parent=11 // pred_fallthru
          _
        // Predicated region
        $region33: #{tpu_custom_call.1} parent=11 // pred_check
          %p482 = pneg %p426
        $region34: #{tpu_custom_call.1} parent=11 // pred_check_branch
          %484 = sbr.rel (%p482) target = $region36
        $region35: #{tpu_custom_call.1} parent=11 // pred_region
          _
        $region36: #{tpu_custom_call.1} parent=11 // pred_fallthru
          _
      $region12: #{tpu_custom_call.1} parent=5 // pred_fallthru
        _
      %p485 = scmp.lt.s32.totalorder %s28, 4
      // Predicated region
      $region37: #{tpu_custom_call.1} parent=5 // pred_check
        %p486 = pneg %p485
      $region38: #{tpu_custom_call.1} parent=5 // pred_check_branch
        %488 = sbr.rel (%p486) target = $region40
      $region39: #{tpu_custom_call.1} parent=5 // pred_region
        // Predicated region
        $region41: #{tpu_custom_call.1} parent=39 // pred_check
          %p489 = pneg %p60
        $region42: #{tpu_custom_call.1} parent=39 // pred_check_branch
          %491 = sbr.rel (%p489) target = $region44
        $region43: #{tpu_custom_call.1} parent=39 // pred_region
          %s492 = sand.u32 %s50, 1
          %s493 = scalar_lea.sflag [#allocation5], %s492
          %s494 = sand.u32 %s50, 1
          %s495 = smul.addr %s494, 8
          %s496 = scalar_lea.vmem [#allocation4], %s495
          %s498 = ssub.s32 128, 128
          %499 = vsyncadd %s493, %s498
          %s500 = smul.addr %s35, 128
          %s501 = scalar_lea.hbm %s0, %s500
          %s503 = sshll.u32 %s496, 4
          %s504 = int_to_ptr.vmem [resolvable:$true] %s503
          %506 = dma.hbm_to_vmem [thread:$0]  %s501, 128, %s504, %s493
        $region44: #{tpu_custom_call.1} parent=39 // pred_fallthru
          _
        // Predicated region
        $region45: #{tpu_custom_call.1} parent=39 // pred_check
          %p507 = pneg %p86
        $region46: #{tpu_custom_call.1} parent=39 // pred_check_branch
          %509 = sbr.rel (%p507) target = $region48
        $region47: #{tpu_custom_call.1} parent=39 // pred_region
          %p510 = scmp.lt.s32.totalorder %s35, 1
          %s511 = scalar_select %p510, %s35, 1
          %s512 = scalar_lea.vmem %s1, %s511
        $region48: #{tpu_custom_call.1} parent=39 // pred_fallthru
          _
        // Predicated region
        $region49: #{tpu_custom_call.1} parent=39 // pred_check
          %p513 = pneg %p196
        $region50: #{tpu_custom_call.1} parent=39 // pred_check_branch
          %515 = sbr.rel (%p513) target = $region52
        $region51: #{tpu_custom_call.1} parent=39 // pred_region
          %p516 = scmp.lt.s32.totalorder %s36, 1
          %s517 = scalar_select %p516, %s36, 1
          %s518 = scalar_lea.vmem %s6, %s517
        $region52: #{tpu_custom_call.1} parent=39 // pred_fallthru
          _
        // Predicated region
        $region53: #{tpu_custom_call.1} parent=39 // pred_check
          %p519 = pneg %p222
        $region54: #{tpu_custom_call.1} parent=39 // pred_check_branch
          %521 = sbr.rel (%p519) target = $region56
        $region55: #{tpu_custom_call.1} parent=39 // pred_region
          %p522 = scmp.lt.s32.totalorder %s36, 1
          %s523 = scalar_select %p522, %s36, 1
          %s524 = scalar_lea.vmem %s7, %s523
        $region56: #{tpu_custom_call.1} parent=39 // pred_fallthru
          _
        // Predicated region
        $region57: #{tpu_custom_call.1} parent=39 // pred_check
          %p525 = pneg %p248
        $region58: #{tpu_custom_call.1} parent=39 // pred_check_branch
          %527 = sbr.rel (%p525) target = $region60
        $region59: #{tpu_custom_call.1} parent=39 // pred_region
          %p528 = scmp.lt.s32.totalorder %s36, 1
          %s529 = scalar_select %p528, %s36, 1
          %s530 = scalar_lea.vmem %s8, %s529
        $region60: #{tpu_custom_call.1} parent=39 // pred_fallthru
          _
        // Predicated region
        $region61: #{tpu_custom_call.1} parent=39 // pred_check
          %p531 = pneg %p274
        $region62: #{tpu_custom_call.1} parent=39 // pred_check_branch
          %533 = sbr.rel (%p531) target = $region64
        $region63: #{tpu_custom_call.1} parent=39 // pred_region
          %p534 = scmp.lt.s32.totalorder %s36, 1
          %s535 = scalar_select %p534, %s36, 1
          %s536 = scalar_lea.vmem %s9, %s535
        $region64: #{tpu_custom_call.1} parent=39 // pred_fallthru
          _
        // Predicated region
        $region65: #{tpu_custom_call.1} parent=39 // pred_check
          %p537 = pneg %p300
        $region66: #{tpu_custom_call.1} parent=39 // pred_check_branch
          %539 = sbr.rel (%p537) target = $region68
        $region67: #{tpu_custom_call.1} parent=39 // pred_region
          %p540 = scmp.lt.s32.totalorder %s36, 1
          %s541 = scalar_select %p540, %s36, 1
          %s542 = scalar_lea.vmem %s10, %s541
        $region68: #{tpu_custom_call.1} parent=39 // pred_fallthru
          _
        // Predicated region
        $region69: #{tpu_custom_call.1} parent=39 // pred_check
          %p543 = pneg %p326
        $region70: #{tpu_custom_call.1} parent=39 // pred_check_branch
          %545 = sbr.rel (%p543) target = $region72
        $region71: #{tpu_custom_call.1} parent=39 // pred_region
          %p546 = scmp.lt.s32.totalorder %s36, 1
          %s547 = scalar_select %p546, %s36, 1
          %s548 = scalar_lea.vmem %s11, %s547
        $region72: #{tpu_custom_call.1} parent=39 // pred_fallthru
          _
        // Predicated region
        $region73: #{tpu_custom_call.1} parent=39 // pred_check
          %p549 = pneg %p352
        $region74: #{tpu_custom_call.1} parent=39 // pred_check_branch
          %551 = sbr.rel (%p549) target = $region76
        $region75: #{tpu_custom_call.1} parent=39 // pred_region
          %p552 = scmp.lt.s32.totalorder %s36, 1
          %s553 = scalar_select %p552, %s36, 1
          %s554 = scalar_lea.vmem %s12, %s553
        $region76: #{tpu_custom_call.1} parent=39 // pred_fallthru
          _
        // Predicated region
        $region77: #{tpu_custom_call.1} parent=39 // pred_check
          %p555 = pneg %p378
        $region78: #{tpu_custom_call.1} parent=39 // pred_check_branch
          %557 = sbr.rel (%p555) target = $region80
        $region79: #{tpu_custom_call.1} parent=39 // pred_region
          %p558 = scmp.lt.s32.totalorder %s36, 1
          %s559 = scalar_select %p558, %s36, 1
          %s560 = scalar_lea.vmem %s13, %s559
        $region80: #{tpu_custom_call.1} parent=39 // pred_fallthru
          _
      $region40: #{tpu_custom_call.1} parent=5 // pred_fallthru
        _
      %p561 = scmp.le.s32.totalorder 1, %s28
      %p562 = scmp.lt.s32.totalorder %s28, 5
      %p563 = pnand %p561, %p562
      %p564 = pneg %p563
      // Predicated region
      $region81: #{tpu_custom_call.1} parent=5 // pred_check
        _
      $region82: #{tpu_custom_call.1} parent=5 // pred_check_branch
        %566 = sbr.rel (%p563) target = $region84
      $region83: #{tpu_custom_call.1} parent=5 // pred_region
        %s567 = ssub.s32 %s28, 1
        %s568 = sand.u32 %s53, 1
        %s569 = scalar_lea.sflag [#allocation5], %s568
        %s570 = sand.u32 %s53, 1
        %s571 = smul.addr %s570, 8
        %s572 = scalar_lea.vmem [#allocation4], %s571
        // Predicated region
        $region85: #{tpu_custom_call.1} parent=83 // pred_check
          %p573 = pneg %p66
        $region86: #{tpu_custom_call.1} parent=83 // pred_check_branch
          %575 = sbr.rel (%p573) target = $region88
        $region87: #{tpu_custom_call.1} parent=83 // pred_region
          %576 = dma.done %s569, 128
        $region88: #{tpu_custom_call.1} parent=83 // pred_fallthru
          _
        %s577 = sand.u32 %s53, 1
        %s578 = scalar_lea.sflag [#allocation5], %s577
        %s579 = sand.u32 %s53, 1
        %s580 = smul.addr %s579, 8
        %s581 = scalar_lea.vmem [#allocation4], %s580
        %p582 = pneg %p66
        %p583 = pneg %p63
        %p584 = scmp.lt.s32.totalorder %s37, 1
        %s585 = scalar_select %p584, %s37, 1
        %s586 = scalar_lea.vmem %s1, %s585
        %p587 = pneg %p92
        %p588 = pneg %p89
        %p589 = pneg %p113
        %p590 = pneg %p110
        %p591 = pneg %p134
        %p592 = pneg %p131
        %p593 = pneg %p155
        %p594 = pneg %p152
        %p595 = pneg %p176
        %p596 = pneg %p173
        %p597 = scmp.lt.s32.totalorder %s38, 1
        %s598 = scalar_select %p597, %s38, 1
        %s599 = scalar_lea.vmem %s6, %s598
        %p600 = pneg %p202
        %p601 = pneg %p199
        %p602 = scmp.lt.s32.totalorder %s38, 1
        %s603 = scalar_select %p602, %s38, 1
        %s604 = scalar_lea.vmem %s7, %s603
        %p605 = pneg %p228
        %p606 = pneg %p225
        %p607 = scmp.lt.s32.totalorder %s38, 1
        %s608 = scalar_select %p607, %s38, 1
        %s609 = scalar_lea.vmem %s8, %s608
        %p610 = pneg %p254
        %p611 = pneg %p251
        %p612 = scmp.lt.s32.totalorder %s38, 1
        %s613 = scalar_select %p612, %s38, 1
        %s614 = scalar_lea.vmem %s9, %s613
        %p615 = pneg %p280
        %p616 = pneg %p277
        %p617 = scmp.lt.s32.totalorder %s38, 1
        %s618 = scalar_select %p617, %s38, 1
        %s619 = scalar_lea.vmem %s10, %s618
        %p620 = pneg %p306
        %p621 = pneg %p303
        %p622 = scmp.lt.s32.totalorder %s38, 1
        %s623 = scalar_select %p622, %s38, 1
        %s624 = scalar_lea.vmem %s11, %s623
        %p625 = pneg %p332
        %p626 = pneg %p329
        %p627 = scmp.lt.s32.totalorder %s38, 1
        %s628 = scalar_select %p627, %s38, 1
        %s629 = scalar_lea.vmem %s12, %s628
        %p630 = pneg %p358
        %p631 = pneg %p355
        %p632 = scmp.lt.s32.totalorder %s38, 1
        %s633 = scalar_select %p632, %s38, 1
        %s634 = scalar_lea.vmem %s13, %s633
        %p635 = pneg %p384
        %p636 = pneg %p381
        %p637 = pneg %p405
        %p638 = pneg %p402
        %p639 = pneg %p426
        %p640 = pneg %p423
        %p641 = pneg %p452
        %p642 = pneg %p449
        %s643 = sand.u32 %s439, 1
        %s644 = scalar_lea.sflag [#allocation6], %s643
        %s645 = sand.u32 %s439, 1
        %s646 = smul.addr %s645, 8
        %s647 = scalar_lea.vmem [#allocation7], %s646
        %p648 = scmp.lt.s32.totalorder %s37, 1
        %s649 = scalar_select %p648, %s37, 1
        %s650 = scalar_lea.vmem %s1, %s649
        %p651 = scmp.lt.s32.totalorder %s38, 1
        %s652 = scalar_select %p651, %s38, 1
        %s653 = scalar_lea.vmem %s6, %s652
        %p654 = scmp.lt.s32.totalorder %s38, 1
        %s655 = scalar_select %p654, %s38, 1
        %s656 = scalar_lea.vmem %s7, %s655
        %p657 = scmp.lt.s32.totalorder %s38, 1
        %s658 = scalar_select %p657, %s38, 1
        %s659 = scalar_lea.vmem %s8, %s658
        %p660 = scmp.lt.s32.totalorder %s38, 1
        %s661 = scalar_select %p660, %s38, 1
        %s662 = scalar_lea.vmem %s9, %s661
        %p663 = scmp.lt.s32.totalorder %s38, 1
        %s664 = scalar_select %p663, %s38, 1
        %s665 = scalar_lea.vmem %s10, %s664
        %p666 = scmp.lt.s32.totalorder %s38, 1
        %s667 = scalar_select %p666, %s38, 1
        %s668 = scalar_lea.vmem %s11, %s667
        %p669 = scmp.lt.s32.totalorder %s38, 1
        %s670 = scalar_select %p669, %s38, 1
        %s671 = scalar_lea.vmem %s12, %s670
        %p672 = scmp.lt.s32.totalorder %s38, 1
        %s673 = scalar_select %p672, %s38, 1
        %s674 = scalar_lea.vmem %s13, %s673
        %p676 = scmp.eq.s32.totalorder %s38, 0
        // Predicated region
        $region89: #{tpu_custom_call.1} parent=83 // pred_check
          %p677 = pneg %p676
        $region90: #{tpu_custom_call.1} parent=83 // pred_check_branch
          %679 = sbr.rel (%p677) target = $region92
        $region91: #{tpu_custom_call.1} parent=83 // pred_region
          %v680 = vld [vmem:[%s572] sm:$0xff]
          %vm681 = vcmask 261120
          %682 = vst.msk [vmem:[#allocation2] sm:$0xff] %vm681, %v680
        $region92: #{tpu_custom_call.1} parent=83 // pred_fallthru
          _
        %v683 = vld [vmem:[#allocation2] sm:$0xff]
        %v684 = vld [vmem:[%s650] sm:$0x1]
        %v685 = vsub.f32 %v684, 1.0
        %v686 = vmul.f32 %v685, 1e+09
        %s687 = smul.u32 %s38, 4
        %s688 = smul.addr %s687, 4
        %s689 = scalar_lea.vmem %s2, %s688
        %v690 = vld [vmem:[%s689] sm:$0xf]
        %v691 = vld [vmem:[%s689 + $0x4] sm:$0xf]
        %v692 = vld [vmem:[%s689 + $0x8] sm:$0xf]
        %v693 = vld [vmem:[%s689 + $0xc] sm:$0xf]
        %s694 = smul.addr %s687, 4
        %s695 = scalar_lea.vmem %s3, %s694
        %v696 = vld [vmem:[%s695] sm:$0xf]
        %v697 = vld [vmem:[%s695 + $0x4] sm:$0xf]
        %v698 = vld [vmem:[%s695 + $0x8] sm:$0xf]
        %v699 = vld [vmem:[%s695 + $0xc] sm:$0xf]
        %s700 = smul.addr %s687, 4
        %s701 = scalar_lea.vmem %s4, %s700
        %v702 = vld [vmem:[%s701] sm:$0xf]
        %v703 = vld [vmem:[%s701 + $0x4] sm:$0xf]
        %v704 = vld [vmem:[%s701 + $0x8] sm:$0xf]
        %v705 = vld [vmem:[%s701 + $0xc] sm:$0xf]
        %s706 = smul.u32 %s38, 8
        %s707 = smul.addr %s706, 4
        %s708 = scalar_lea.vmem %s5, %s707
        %v709 = vld [vmem:[%s708] sm:$0xf]
        %v710 = vld [vmem:[%s708 + $0x4] sm:$0xf]
        %v711 = vld [vmem:[%s708 + $0x8] sm:$0xf]
        %v712 = vld [vmem:[%s708 + $0xc] sm:$0xf]
        %v713 = vld [vmem:[%s708 + $0x10] sm:$0xf]
        %v714 = vld [vmem:[%s708 + $0x14] sm:$0xf]
        %v715 = vld [vmem:[%s708 + $0x18] sm:$0xf]
        %v716 = vld [vmem:[%s708 + $0x1c] sm:$0xf]
        %v717 = vld [vmem:[%s665] sm:$0x1]
        %v718 = vld [vmem:[%s668] sm:$0x1]
        %vm719 = vcmask 261120
        %v720 = vsel %vm719, %v683, 0.0
        %721 = vadd.xlane.f32.xlu0 %v720
        %v722 = vpop.xlane.xlu0 %721
        %v723 = vrcp.pop 32.0
        %v724 = vmul.f32 %v722, %v723
        %v725 = vsub.f32 %v683, %v724
        %v726 = vmul.f32 %v725, %v725
        %v727 = vsel %vm719, %v726, 0.0
        %728 = vadd.xlane.f32.xlu0 %v727
        %v729 = vpop.xlane.xlu0 %728
        %v730 = vrcp.pop 31.0
        %v731 = vmul.f32 %v729, %v730
        %v732 = vrsqrt.pop %v731
        %v733 = vmul.f32 %v731, %v732
        %vm734 = vcmp.eq.f32.partialorder %v731, inf
        %v735 = vsel %vm734, %v731, %v733
        %vm736 = vcmp.eq.f32.partialorder %v731, 0.0
        %v737 = vand.u32 %v731, 2147483648
        %v738 = vsel %vm736, %v737, %v735
        %v739 = vadd.f32 %v738, 1e-06
        %v740 = vrcp.pop %v739
        %v742 = vlaneseq
        %v743 = vshrl.u32 %v742, 7
        %v744 = vsub.s32 0, %v743
        %v745 = vrot.slane %v717, %v744
        %v747 = vmul.f32 %v745, %v725
        %v748 = vmul.f32 %v747, %v740
        %v750 = vlaneseq
        %v751 = vshrl.u32 %v750, 7
        %v752 = vsub.s32 0, %v751
        %v753 = vrot.slane %v718, %v752
        %v755 = vadd.f32 %v748, %v753
        %v756 = vpack.c.bf16 %v755, %v755
        %v757 = vld [vmem:[%s653] sm:$0x1]
        %v759 = vlaneseq
        %v760 = vshrl.u32 %v759, 7
        %v761 = vsub.s32 0, %v760
        %v762 = vrot.slane %v757, %v761
        %v768 = vunpack.c.l.b16 %v690
        %v769 = vunpack.c.l.b16 %v691
        %v770 = vunpack.c.l.b16 %v692
        %v771 = vunpack.c.l.b16 %v693
        %v772 = vpack.c.b16 %v769, %v768
        %v773 = vpack.c.b16 %v771, %v770
        %v777 = vsel %vm719, %v756, 0
        %779 = vmatprep.subr.bf16.mxu0 0
        %780 = vmatpush1.bf16.msra.mxu0 %v772
        %781 = vmatprep.subr.bf16.mxu0 0
        %782 = vmatpush1.bf16.msra.mxu0 %v773
        %783 = vmatprep.subr.bf16.mxu0 0
        %784 = vmatpush1.bf16.msra.mxu0 0
        %785 = vmatprep.subr.bf16.mxu0 0
        %786 = vmatpush1.bf16.msra.mxu0 0
        %787 = vmatprep.subr.bf16.mxu0 0
        %788 = vmatpush1.bf16.msra.mxu0 0
        %789 = vmatprep.subr.bf16.mxu0 0
        %790 = vmatpush1.bf16.msra.mxu0 0
        %791 = vmatprep.subr.bf16.mxu0 0
        %792 = vmatpush1.bf16.msra.mxu0 0
        %793 = vmatprep.subr.bf16.mxu0 0
        %794 = vmatpush1.bf16.msra.mxu0 0
        %795 = vmatprep.subr.bf16.mxu0 0
        %796 = vmatpush1.bf16.msra.mxu0 0
        %797 = vmatprep.subr.bf16.mxu0 0
        %798 = vmatpush1.bf16.msra.mxu0 0
        %799 = vmatprep.subr.bf16.mxu0 0
        %800 = vmatpush1.bf16.msra.mxu0 0
        %801 = vmatprep.subr.bf16.mxu0 0
        %802 = vmatpush1.bf16.msra.mxu0 0
        %803 = vmatprep.subr.bf16.mxu0 0
        %804 = vmatpush1.bf16.msra.mxu0 0
        %805 = vmatprep.subr.bf16.mxu0 0
        %806 = vmatpush1.bf16.msra.mxu0 0
        %807 = vmatprep.subr.bf16.mxu0 0
        %808 = vmatpush1.bf16.msra.mxu0 0
        %809 = vmatprep.subr.bf16.mxu0 0
        %810 = vmatpush1.bf16.msra.mxu0 0
        %811 = vmatprep.mubr.bf16.mxu0 0
        %812 = vmatmul.mubr.bf16.gmra.mrb[0].mxu0 %v777
        %v813 = vpop.f32.mrb[0].mxu0
        %v814 = vadd.f32 %v762, %v813
        %v815 = vpop.f32.mrb[0].mxu0
        %v816 = vpop.f32.mrb[0].mxu0
        %v817 = vpop.f32.mrb[0].mxu0
        %818 = vdwg.mxu0
        %v819 = vpack.c.bf16 %v814, %v814
        %821 = vrot.lane.b32.xlu0 %v814, 96
        %v822 = vpop.permute.xlu0 %821
        %824 = vxpose.xlu0.b32.start [1/16] %v822, 128
        %825 = vxpose.xlu0.b32.cont [2/16] 0.0, 128
        %826 = vxpose.xlu0.b32.cont [3/16] 0.0, 128
        %827 = vxpose.xlu0.b32.cont [4/16] 0.0, 128
        %828 = vxpose.xlu0.b32.cont [5/16] 0.0, 128
        %829 = vxpose.xlu0.b32.cont [6/16] 0.0, 128
        %830 = vxpose.xlu0.b32.cont [7/16] 0.0, 128
        %831 = vxpose.xlu0.b32.cont [8/16] 0.0, 128
        %832 = vxpose.xlu0.b32.cont [9/16] 0.0, 128
        %833 = vxpose.xlu0.b32.cont [10/16] 0.0, 128
        %834 = vxpose.xlu0.b32.cont [11/16] 0.0, 128
        %835 = vxpose.xlu0.b32.cont [12/16] 0.0, 128
        %836 = vxpose.xlu0.b32.cont [13/16] 0.0, 128
        %837 = vxpose.xlu0.b32.cont [14/16] 0.0, 128
        %838 = vxpose.xlu0.b32.cont [15/16] 0.0, 128
        %839 = vxpose.xlu0.b32.end [16/16] 0.0, 128
        %v840 = vpop.trf.xlu0
        %v841 = vpop.trf.xlu0
        %v842 = vpop.trf.xlu0
        %v843 = vpop.trf.xlu0
        %v844 = vpop.trf.xlu0
        %v845 = vpop.trf.xlu0
        %v846 = vpop.trf.xlu0
        %v847 = vpop.trf.xlu0
        %v848 = vpop.trf.xlu0
        %v849 = vpop.trf.xlu0
        %v850 = vpop.trf.xlu0
        %v851 = vpop.trf.xlu0
        %v852 = vpop.trf.xlu0
        %v853 = vpop.trf.xlu0
        %v854 = vpop.trf.xlu0
        %v855 = vpop.trf.xlu0
        %v856 = vpack.c.bf16 %v841, %v840
        %v857 = vpack.c.bf16 %v843, %v842
        %vm858 = vcmask 64512
        %v860 = vsel %vm858, %v819, 0
        %vm862 = vcmask 1043456
        %v864 = vsel %vm862, %v856, 0
        %866 = vmatprep.subr.bf16.mxu0 0
        %867 = vmatpush1.bf16.msra.mxu0 %v864
        %868 = vmatprep.subr.bf16.mxu0 0
        %869 = vmatpush1.bf16.msra.mxu0 0
        %870 = vmatprep.subr.bf16.mxu0 0
        %871 = vmatpush1.bf16.msra.mxu0 0
        %872 = vmatprep.subr.bf16.mxu0 0
        %873 = vmatpush1.bf16.msra.mxu0 0
        %874 = vmatprep.subr.bf16.mxu0 0
        %875 = vmatpush1.bf16.msra.mxu0 0
        %876 = vmatprep.subr.bf16.mxu0 0
        %877 = vmatpush1.bf16.msra.mxu0 0
        %878 = vmatprep.subr.bf16.mxu0 0
        %879 = vmatpush1.bf16.msra.mxu0 0
        %880 = vmatprep.subr.bf16.mxu0 0
        %881 = vmatpush1.bf16.msra.mxu0 0
        %882 = vmatprep.subr.bf16.mxu0 0
        %883 = vmatpush1.bf16.msra.mxu0 0
        %884 = vmatprep.subr.bf16.mxu0 0
        %885 = vmatpush1.bf16.msra.mxu0 0
        %886 = vmatprep.subr.bf16.mxu0 0
        %887 = vmatpush1.bf16.msra.mxu0 0
        %888 = vmatprep.subr.bf16.mxu0 0
        %889 = vmatpush1.bf16.msra.mxu0 0
        %890 = vmatprep.subr.bf16.mxu0 0
        %891 = vmatpush1.bf16.msra.mxu0 0
        %892 = vmatprep.subr.bf16.mxu0 0
        %893 = vmatpush1.bf16.msra.mxu0 0
        %894 = vmatprep.subr.bf16.mxu0 0
        %895 = vmatpush1.bf16.msra.mxu0 0
        %896 = vmatprep.subr.bf16.mxu0 0
        %897 = vmatpush1.bf16.msra.mxu0 0
        %898 = vmatprep.mubr.bf16.mxu0 0
        %899 = vmatmul.mubr.bf16.gmra.mrb[0].mxu0 %v860
        %v900 = vpop.f32.mrb[0].mxu0
        %v901 = vadd.f32 0.0, %v900
        %v902 = vpop.f32.mrb[0].mxu0
        %v903 = vpop.f32.mrb[0].mxu0
        %v904 = vpop.f32.mrb[0].mxu0
        %905 = vdwg.mxu0
        %v906 = vmul.f32 %v901, 0.35355338
        %v908 = vlaneseq
        %v909 = vshrl.u32 %v908, 7
        %v910 = vsub.s32 0, %v909
        %v911 = vrot.slane %v686, %v910
        %v913 = vadd.f32 %v906, %v911
        %v914 = vsel %vm858, %v913, -inf
        %915 = vmax.xlane.f32.xlu0 %v914
        %v916 = vpop.xlane.xlu0 %915
        %v917 = vsub.f32 %v913, %v916
        %v918 = vmul.f32 %v917, 1.442695
        %v919 = vpow.pop %v918
        %v920 = vsel %vm858, %v919, 0.0
        %921 = vadd.xlane.f32.xlu0 %v920
        %v922 = vpop.xlane.xlu0 %921
        %v923 = vrcp.pop %v922
        %v924 = vmul.f32 %v919, %v923
        %v925 = vpack.c.bf16 %v924, %v924
        %927 = vrot.lane.b32.xlu0 %v819, 64
        %v928 = vpop.permute.xlu0 %927
        %v930 = vsel %vm858, %v925, 0
        %v933 = vsel %vm862, %v928, 0
        %935 = vmatprep.subr.bf16.mxu0 0
        %936 = vmatpush1.bf16.msra.mxu0 %v933
        %937 = vmatprep.subr.bf16.mxu0 0
        %938 = vmatpush1.bf16.msra.mxu0 0
        %939 = vmatprep.subr.bf16.mxu0 0
        %940 = vmatpush1.bf16.msra.mxu0 0
        %941 = vmatprep.subr.bf16.mxu0 0
        %942 = vmatpush1.bf16.msra.mxu0 0
        %943 = vmatprep.subr.bf16.mxu0 0
        %944 = vmatpush1.bf16.msra.mxu0 0
        %945 = vmatprep.subr.bf16.mxu0 0
        %946 = vmatpush1.bf16.msra.mxu0 0
        %947 = vmatprep.subr.bf16.mxu0 0
        %948 = vmatpush1.bf16.msra.mxu0 0
        %949 = vmatprep.subr.bf16.mxu0 0
        %950 = vmatpush1.bf16.msra.mxu0 0
        %951 = vmatprep.subr.bf16.mxu0 0
        %952 = vmatpush1.bf16.msra.mxu0 0
        %953 = vmatprep.subr.bf16.mxu0 0
        %954 = vmatpush1.bf16.msra.mxu0 0
        %955 = vmatprep.subr.bf16.mxu0 0
        %956 = vmatpush1.bf16.msra.mxu0 0
        %957 = vmatprep.subr.bf16.mxu0 0
        %958 = vmatpush1.bf16.msra.mxu0 0
        %959 = vmatprep.subr.bf16.mxu0 0
        %960 = vmatpush1.bf16.msra.mxu0 0
        %961 = vmatprep.subr.bf16.mxu0 0
        %962 = vmatpush1.bf16.msra.mxu0 0
        %963 = vmatprep.subr.bf16.mxu0 0
        %964 = vmatpush1.bf16.msra.mxu0 0
        %965 = vmatprep.subr.bf16.mxu0 0
        %966 = vmatpush1.bf16.msra.mxu0 0
        %967 = vmatprep.mubr.bf16.mxu0 0
        %968 = vmatmul.mubr.bf16.gmra.mrb[0].mxu0 %v930
        %v969 = vpop.f32.mrb[0].mxu0
        %v970 = vadd.f32 0.0, %v969
        %v971 = vpop.f32.mrb[0].mxu0
        %v972 = vpop.f32.mrb[0].mxu0
        %v973 = vpop.f32.mrb[0].mxu0
        %974 = vdwg.mxu0
        %975 = vst.msk [vmem:[#allocation3] sm:$0xff] %vm858, %v970
        %976 = vrot.lane.b32.xlu0 %v819, 120
        %v977 = vpop.permute.xlu0 %976
        %v979 = vrot.slane %v856, 4
        %v981 = vsel %vm858, %v977, 0
        %v984 = vsel %vm862, %v979, 0
        %986 = vmatprep.subr.bf16.mxu0 0
        %987 = vmatpush1.bf16.msra.mxu0 %v984
        %988 = vmatprep.subr.bf16.mxu0 0
        %989 = vmatpush1.bf16.msra.mxu0 0
        %990 = vmatprep.subr.bf16.mxu0 0
        %991 = vmatpush1.bf16.msra.mxu0 0
        %992 = vmatprep.subr.bf16.mxu0 0
        %993 = vmatpush1.bf16.msra.mxu0 0
        %994 = vmatprep.subr.bf16.mxu0 0
        %995 = vmatpush1.bf16.msra.mxu0 0
        %996 = vmatprep.subr.bf16.mxu0 0
        %997 = vmatpush1.bf16.msra.mxu0 0
        %998 = vmatprep.subr.bf16.mxu0 0
        %999 = vmatpush1.bf16.msra.mxu0 0
        %1000 = vmatprep.subr.bf16.mxu0 0
        %1001 = vmatpush1.bf16.msra.mxu0 0
        %1002 = vmatprep.subr.bf16.mxu0 0
        %1003 = vmatpush1.bf16.msra.mxu0 0
        %1004 = vmatprep.subr.bf16.mxu0 0
        %1005 = vmatpush1.bf16.msra.mxu0 0
        %1006 = vmatprep.subr.bf16.mxu0 0
        %1007 = vmatpush1.bf16.msra.mxu0 0
        %1008 = vmatprep.subr.bf16.mxu0 0
        %1009 = vmatpush1.bf16.msra.mxu0 0
        %1010 = vmatprep.subr.bf16.mxu0 0
        %1011 = vmatpush1.bf16.msra.mxu0 0
        %1012 = vmatprep.subr.bf16.mxu0 0
        %1013 = vmatpush1.bf16.msra.mxu0 0
        %1014 = vmatprep.subr.bf16.mxu0 0
        %1015 = vmatpush1.bf16.msra.mxu0 0
        %1016 = vmatprep.subr.bf16.mxu0 0
        %1017 = vmatpush1.bf16.msra.mxu0 0
        %1018 = vmatprep.mubr.bf16.mxu0 0
        %1019 = vmatmul.mubr.bf16.gmra.mrb[0].mxu0 %v981
        %v1020 = vpop.f32.mrb[0].mxu0
        %v1021 = vadd.f32 0.0, %v1020
        %v1022 = vpop.f32.mrb[0].mxu0
        %v1023 = vpop.f32.mrb[0].mxu0
        %v1024 = vpop.f32.mrb[0].mxu0
        %1025 = vdwg.mxu0
        %v1026 = vmul.f32 %v1021, 0.35355338
        %v1027 = vadd.f32 %v1026, %v911
        %v1028 = vsel %vm858, %v1027, -inf
        %1029 = vmax.xlane.f32.xlu0 %v1028
        %v1030 = vpop.xlane.xlu0 %1029
        %v1031 = vsub.f32 %v1027, %v1030
        %v1032 = vmul.f32 %v1031, 1.442695
        %v1033 = vpow.pop %v1032
        %v1034 = vsel %vm858, %v1033, 0.0
        %1035 = vadd.xlane.f32.xlu0 %v1034
        %v1036 = vpop.xlane.xlu0 %1035
        %v1037 = vrcp.pop %v1036
        %v1038 = vmul.f32 %v1033, %v1037
        %v1039 = vpack.c.bf16 %v1038, %v1038
        %1040 = vrot.lane.b32.xlu0 %v819, 56
        %v1041 = vpop.permute.xlu0 %1040
        %v1043 = vsel %vm858, %v1039, 0
        %v1046 = vsel %vm862, %v1041, 0
        %1048 = vmatprep.subr.bf16.mxu0 0
        %1049 = vmatpush1.bf16.msra.mxu0 %v1046
        %1050 = vmatprep.subr.bf16.mxu0 0
        %1051 = vmatpush1.bf16.msra.mxu0 0
        %1052 = vmatprep.subr.bf16.mxu0 0
        %1053 = vmatpush1.bf16.msra.mxu0 0
        %1054 = vmatprep.subr.bf16.mxu0 0
        %1055 = vmatpush1.bf16.msra.mxu0 0
        %1056 = vmatprep.subr.bf16.mxu0 0
        %1057 = vmatpush1.bf16.msra.mxu0 0
        %1058 = vmatprep.subr.bf16.mxu0 0
        %1059 = vmatpush1.bf16.msra.mxu0 0
        %1060 = vmatprep.subr.bf16.mxu0 0
        %1061 = vmatpush1.bf16.msra.mxu0 0
        %1062 = vmatprep.subr.bf16.mxu0 0
        %1063 = vmatpush1.bf16.msra.mxu0 0
        %1064 = vmatprep.subr.bf16.mxu0 0
        %1065 = vmatpush1.bf16.msra.mxu0 0
        %1066 = vmatprep.subr.bf16.mxu0 0
        %1067 = vmatpush1.bf16.msra.mxu0 0
        %1068 = vmatprep.subr.bf16.mxu0 0
        %1069 = vmatpush1.bf16.msra.mxu0 0
        %1070 = vmatprep.subr.bf16.mxu0 0
        %1071 = vmatpush1.bf16.msra.mxu0 0
        %1072 = vmatprep.subr.bf16.mxu0 0
        %1073 = vmatpush1.bf16.msra.mxu0 0
        %1074 = vmatprep.subr.bf16.mxu0 0
        %1075 = vmatpush1.bf16.msra.mxu0 0
        %1076 = vmatprep.subr.bf16.mxu0 0
        %1077 = vmatpush1.bf16.msra.mxu0 0
        %1078 = vmatprep.subr.bf16.mxu0 0
        %1079 = vmatpush1.bf16.msra.mxu0 0
        %1080 = vmatprep.mubr.bf16.mxu0 0
        %1081 = vmatmul.mubr.bf16.gmra.mrb[0].mxu0 %v1043
        %v1082 = vpop.f32.mrb[0].mxu0
        %v1083 = vadd.f32 0.0, %v1082
        %v1084 = vpop.f32.mrb[0].mxu0
        %v1085 = vpop.f32.mrb[0].mxu0
        %v1086 = vpop.f32.mrb[0].mxu0
        %1087 = vdwg.mxu0
        %1089 = vrot.lane.b32.xlu0 %v1083, 8
        %v1090 = vpop.permute.xlu0 %1089
        %vm1092 = vcmask 130112
        %1093 = vst.msk [vmem:[#allocation3] sm:$0xff] %vm1092, %v1090
        %1094 = vrot.lane.b32.xlu0 %v819, 112
        %v1095 = vpop.permute.xlu0 %1094
        %v1097 = vsel %vm858, %v1095, 0
        %v1100 = vsel %vm862, %v857, 0
        %1102 = vmatprep.subr.bf16.mxu0 0
        %1103 = vmatpush1.bf16.msra.mxu0 %v1100
        %1104 = vmatprep.subr.bf16.mxu0 0
        %1105 = vmatpush1.bf16.msra.mxu0 0
        %1106 = vmatprep.subr.bf16.mxu0 0
        %1107 = vmatpush1.bf16.msra.mxu0 0
        %1108 = vmatprep.subr.bf16.mxu0 0
        %1109 = vmatpush1.bf16.msra.mxu0 0
        %1110 = vmatprep.subr.bf16.mxu0 0
        %1111 = vmatpush1.bf16.msra.mxu0 0
        %1112 = vmatprep.subr.bf16.mxu0 0
        %1113 = vmatpush1.bf16.msra.mxu0 0
        %1114 = vmatprep.subr.bf16.mxu0 0
        %1115 = vmatpush1.bf16.msra.mxu0 0
        %1116 = vmatprep.subr.bf16.mxu0 0
        %1117 = vmatpush1.bf16.msra.mxu0 0
        %1118 = vmatprep.subr.bf16.mxu0 0
        %1119 = vmatpush1.bf16.msra.mxu0 0
        %1120 = vmatprep.subr.bf16.mxu0 0
        %1121 = vmatpush1.bf16.msra.mxu0 0
        %1122 = vmatprep.subr.bf16.mxu0 0
        %1123 = vmatpush1.bf16.msra.mxu0 0
        %1124 = vmatprep.subr.bf16.mxu0 0
        %1125 = vmatpush1.bf16.msra.mxu0 0
        %1126 = vmatprep.subr.bf16.mxu0 0
        %1127 = vmatpush1.bf16.msra.mxu0 0
        %1128 = vmatprep.subr.bf16.mxu0 0
        %1129 = vmatpush1.bf16.msra.mxu0 0
        %1130 = vmatprep.subr.bf16.mxu0 0
        %1131 = vmatpush1.bf16.msra.mxu0 0
        %1132 = vmatprep.subr.bf16.mxu0 0
        %1133 = vmatpush1.bf16.msra.mxu0 0
        %1134 = vmatprep.mubr.bf16.mxu0 0
        %1135 = vmatmul.mubr.bf16.gmra.mrb[0].mxu0 %v1097
        %v1136 = vpop.f32.mrb[0].mxu0
        %v1137 = vadd.f32 0.0, %v1136
        %v1138 = vpop.f32.mrb[0].mxu0
        %v1139 = vpop.f32.mrb[0].mxu0
        %v1140 = vpop.f32.mrb[0].mxu0
        %1141 = vdwg.mxu0
        %v1142 = vmul.f32 %v1137, 0.35355338
        %v1143 = vadd.f32 %v1142, %v911
        %v1144 = vsel %vm858, %v1143, -inf
        %1145 = vmax.xlane.f32.xlu0 %v1144
        %v1146 = vpop.xlane.xlu0 %1145
        %v1147 = vsub.f32 %v1143, %v1146
        %v1148 = vmul.f32 %v1147, 1.442695
        %v1149 = vpow.pop %v1148
        %v1150 = vsel %vm858, %v1149, 0.0
        %1151 = vadd.xlane.f32.xlu0 %v1150
        %v1152 = vpop.xlane.xlu0 %1151
        %v1153 = vrcp.pop %v1152
        %v1154 = vmul.f32 %v1149, %v1153
        %v1155 = vpack.c.bf16 %v1154, %v1154
        %1156 = vrot.lane.b32.xlu0 %v819, 48
        %v1157 = vpop.permute.xlu0 %1156
        %v1159 = vsel %vm858, %v1155, 0
        %v1162 = vsel %vm862, %v1157, 0
        %1164 = vmatprep.subr.bf16.mxu0 0
        %1165 = vmatpush1.bf16.msra.mxu0 %v1162
        %1166 = vmatprep.subr.bf16.mxu0 0
        %1167 = vmatpush1.bf16.msra.mxu0 0
        %1168 = vmatprep.subr.bf16.mxu0 0
        %1169 = vmatpush1.bf16.msra.mxu0 0
        %1170 = vmatprep.subr.bf16.mxu0 0
        %1171 = vmatpush1.bf16.msra.mxu0 0
        %1172 = vmatprep.subr.bf16.mxu0 0
        %1173 = vmatpush1.bf16.msra.mxu0 0
        %1174 = vmatprep.subr.bf16.mxu0 0
        %1175 = vmatpush1.bf16.msra.mxu0 0
        %1176 = vmatprep.subr.bf16.mxu0 0
        %1177 = vmatpush1.bf16.msra.mxu0 0
        %1178 = vmatprep.subr.bf16.mxu0 0
        %1179 = vmatpush1.bf16.msra.mxu0 0
        %1180 = vmatprep.subr.bf16.mxu0 0
        %1181 = vmatpush1.bf16.msra.mxu0 0
        %1182 = vmatprep.subr.bf16.mxu0 0
        %1183 = vmatpush1.bf16.msra.mxu0 0
        %1184 = vmatprep.subr.bf16.mxu0 0
        %1185 = vmatpush1.bf16.msra.mxu0 0
        %1186 = vmatprep.subr.bf16.mxu0 0
        %1187 = vmatpush1.bf16.msra.mxu0 0
        %1188 = vmatprep.subr.bf16.mxu0 0
        %1189 = vmatpush1.bf16.msra.mxu0 0
        %1190 = vmatprep.subr.bf16.mxu0 0
        %1191 = vmatpush1.bf16.msra.mxu0 0
        %1192 = vmatprep.subr.bf16.mxu0 0
        %1193 = vmatpush1.bf16.msra.mxu0 0
        %1194 = vmatprep.subr.bf16.mxu0 0
        %1195 = vmatpush1.bf16.msra.mxu0 0
        %1196 = vmatprep.mubr.bf16.mxu0 0
        %1197 = vmatmul.mubr.bf16.gmra.mrb[0].mxu0 %v1159
        %v1198 = vpop.f32.mrb[0].mxu0
        %v1199 = vadd.f32 0.0, %v1198
        %v1200 = vpop.f32.mrb[0].mxu0
        %v1201 = vpop.f32.mrb[0].mxu0
        %v1202 = vpop.f32.mrb[0].mxu0
        %1203 = vdwg.mxu0
        %1205 = vrot.lane.b32.xlu0 %v1199, 16
        %v1206 = vpop.permute.xlu0 %1205
        %vm1208 = vcmask 195712
        %1209 = vst.msk [vmem:[#allocation3] sm:$0xff] %vm1208, %v1206
        %1210 = vrot.lane.b32.xlu0 %v819, 104
        %v1211 = vpop.permute.xlu0 %1210
        %v1213 = vrot.slane %v857, 4
        %v1215 = vsel %vm858, %v1211, 0
        %v1218 = vsel %vm862, %v1213, 0
        %1220 = vmatprep.subr.bf16.mxu0 0
        %1221 = vmatpush1.bf16.msra.mxu0 %v1218
        %1222 = vmatprep.subr.bf16.mxu0 0
        %1223 = vmatpush1.bf16.msra.mxu0 0
        %1224 = vmatprep.subr.bf16.mxu0 0
        %1225 = vmatpush1.bf16.msra.mxu0 0
        %1226 = vmatprep.subr.bf16.mxu0 0
        %1227 = vmatpush1.bf16.msra.mxu0 0
        %1228 = vmatprep.subr.bf16.mxu0 0
        %1229 = vmatpush1.bf16.msra.mxu0 0
        %1230 = vmatprep.subr.bf16.mxu0 0
        %1231 = vmatpush1.bf16.msra.mxu0 0
        %1232 = vmatprep.subr.bf16.mxu0 0
        %1233 = vmatpush1.bf16.msra.mxu0 0
        %1234 = vmatprep.subr.bf16.mxu0 0
        %1235 = vmatpush1.bf16.msra.mxu0 0
        %1236 = vmatprep.subr.bf16.mxu0 0
        %1237 = vmatpush1.bf16.msra.mxu0 0
        %1238 = vmatprep.subr.bf16.mxu0 0
        %1239 = vmatpush1.bf16.msra.mxu0 0
        %1240 = vmatprep.subr.bf16.mxu0 0
        %1241 = vmatpush1.bf16.msra.mxu0 0
        %1242 = vmatprep.subr.bf16.mxu0 0
        %1243 = vmatpush1.bf16.msra.mxu0 0
        %1244 = vmatprep.subr.bf16.mxu0 0
        %1245 = vmatpush1.bf16.msra.mxu0 0
        %1246 = vmatprep.subr.bf16.mxu0 0
        %1247 = vmatpush1.bf16.msra.mxu0 0
        %1248 = vmatprep.subr.bf16.mxu0 0
        %1249 = vmatpush1.bf16.msra.mxu0 0
        %1250 = vmatprep.subr.bf16.mxu0 0
        %1251 = vmatpush1.bf16.msra.mxu0 0
        %1252 = vmatprep.mubr.bf16.mxu0 0
        %1253 = vmatmul.mubr.bf16.gmra.mrb[0].mxu0 %v1215
        %v1254 = vpop.f32.mrb[0].mxu0
        %v1255 = vadd.f32 0.0, %v1254
        %v1256 = vpop.f32.mrb[0].mxu0
        %v1257 = vpop.f32.mrb[0].mxu0
        %v1258 = vpop.f32.mrb[0].mxu0
        %1259 = vdwg.mxu0
        %v1260 = vmul.f32 %v1255, 0.35355338
        %v1261 = vadd.f32 %v1260, %v911
        %v1262 = vsel %vm858, %v1261, -inf
        %1263 = vmax.xlane.f32.xlu0 %v1262
        %v1264 = vpop.xlane.xlu0 %1263
        %v1265 = vsub.f32 %v1261, %v1264
        %v1266 = vmul.f32 %v1265, 1.442695
        %v1267 = vpow.pop %v1266
        %v1268 = vsel %vm858, %v1267, 0.0
        %1269 = vadd.xlane.f32.xlu0 %v1268
        %v1270 = vpop.xlane.xlu0 %1269
        %v1271 = vrcp.pop %v1270
        %v1272 = vmul.f32 %v1267, %v1271
        %v1273 = vpack.c.bf16 %v1272, %v1272
        %1274 = vrot.lane.b32.xlu0 %v819, 40
        %v1275 = vpop.permute.xlu0 %1274
        %v1277 = vsel %vm858, %v1273, 0
        %v1280 = vsel %vm862, %v1275, 0
        %1282 = vmatprep.subr.bf16.mxu0 0
        %1283 = vmatpush1.bf16.msra.mxu0 %v1280
        %1284 = vmatprep.subr.bf16.mxu0 0
        %1285 = vmatpush1.bf16.msra.mxu0 0
        %1286 = vmatprep.subr.bf16.mxu0 0
        %1287 = vmatpush1.bf16.msra.mxu0 0
        %1288 = vmatprep.subr.bf16.mxu0 0
        %1289 = vmatpush1.bf16.msra.mxu0 0
        %1290 = vmatprep.subr.bf16.mxu0 0
        %1291 = vmatpush1.bf16.msra.mxu0 0
        %1292 = vmatprep.subr.bf16.mxu0 0
        %1293 = vmatpush1.bf16.msra.mxu0 0
        %1294 = vmatprep.subr.bf16.mxu0 0
        %1295 = vmatpush1.bf16.msra.mxu0 0
        %1296 = vmatprep.subr.bf16.mxu0 0
        %1297 = vmatpush1.bf16.msra.mxu0 0
        %1298 = vmatprep.subr.bf16.mxu0 0
        %1299 = vmatpush1.bf16.msra.mxu0 0
        %1300 = vmatprep.subr.bf16.mxu0 0
        %1301 = vmatpush1.bf16.msra.mxu0 0
        %1302 = vmatprep.subr.bf16.mxu0 0
        %1303 = vmatpush1.bf16.msra.mxu0 0
        %1304 = vmatprep.subr.bf16.mxu0 0
        %1305 = vmatpush1.bf16.msra.mxu0 0
        %1306 = vmatprep.subr.bf16.mxu0 0
        %1307 = vmatpush1.bf16.msra.mxu0 0
        %1308 = vmatprep.subr.bf16.mxu0 0
        %1309 = vmatpush1.bf16.msra.mxu0 0
        %1310 = vmatprep.subr.bf16.mxu0 0
        %1311 = vmatpush1.bf16.msra.mxu0 0
        %1312 = vmatprep.subr.bf16.mxu0 0
        %1313 = vmatpush1.bf16.msra.mxu0 0
        %1314 = vmatprep.mubr.bf16.mxu0 0
        %1315 = vmatmul.mubr.bf16.gmra.mrb[0].mxu0 %v1277
        %v1316 = vpop.f32.mrb[0].mxu0
        %v1317 = vadd.f32 0.0, %v1316
        %v1318 = vpop.f32.mrb[0].mxu0
        %v1319 = vpop.f32.mrb[0].mxu0
        %v1320 = vpop.f32.mrb[0].mxu0
        %1321 = vdwg.mxu0
        %1323 = vrot.lane.b32.xlu0 %v1317, 24
        %v1324 = vpop.permute.xlu0 %1323
        %vm1326 = vcmask 261312
        %1327 = vst.msk [vmem:[#allocation3] sm:$0xff] %vm1326, %v1324
        %v1328 = vld [vmem:[#allocation3] sm:$0xff]
        %v1329 = vpack.c.bf16 %v1328, %v1328
        %v1330 = vld [vmem:[%s656] sm:$0x1]
        %v1332 = vlaneseq
        %v1333 = vshrl.u32 %v1332, 7
        %v1334 = vsub.s32 0, %v1333
        %v1335 = vrot.slane %v1330, %v1334
        %v1341 = vunpack.c.l.b16 %v696
        %v1342 = vunpack.c.l.b16 %v697
        %v1343 = vunpack.c.l.b16 %v698
        %v1344 = vunpack.c.l.b16 %v699
        %v1345 = vpack.c.b16 %v1342, %v1341
        %v1346 = vpack.c.b16 %v1344, %v1343
        %v1350 = vsel %vm719, %v1329, 0
        %1352 = vmatprep.subr.bf16.mxu0 0
        %1353 = vmatpush1.bf16.msra.mxu0 %v1345
        %1354 = vmatprep.subr.bf16.mxu0 0
        %1355 = vmatpush1.bf16.msra.mxu0 %v1346
        %1356 = vmatprep.subr.bf16.mxu0 0
        %1357 = vmatpush1.bf16.msra.mxu0 0
        %1358 = vmatprep.subr.bf16.mxu0 0
        %1359 = vmatpush1.bf16.msra.mxu0 0
        %1360 = vmatprep.subr.bf16.mxu0 0
        %1361 = vmatpush1.bf16.msra.mxu0 0
        %1362 = vmatprep.subr.bf16.mxu0 0
        %1363 = vmatpush1.bf16.msra.mxu0 0
        %1364 = vmatprep.subr.bf16.mxu0 0
        %1365 = vmatpush1.bf16.msra.mxu0 0
        %1366 = vmatprep.subr.bf16.mxu0 0
        %1367 = vmatpush1.bf16.msra.mxu0 0
        %1368 = vmatprep.subr.bf16.mxu0 0
        %1369 = vmatpush1.bf16.msra.mxu0 0
        %1370 = vmatprep.subr.bf16.mxu0 0
        %1371 = vmatpush1.bf16.msra.mxu0 0
        %1372 = vmatprep.subr.bf16.mxu0 0
        %1373 = vmatpush1.bf16.msra.mxu0 0
        %1374 = vmatprep.subr.bf16.mxu0 0
        %1375 = vmatpush1.bf16.msra.mxu0 0
        %1376 = vmatprep.subr.bf16.mxu0 0
        %1377 = vmatpush1.bf16.msra.mxu0 0
        %1378 = vmatprep.subr.bf16.mxu0 0
        %1379 = vmatpush1.bf16.msra.mxu0 0
        %1380 = vmatprep.subr.bf16.mxu0 0
        %1381 = vmatpush1.bf16.msra.mxu0 0
        %1382 = vmatprep.subr.bf16.mxu0 0
        %1383 = vmatpush1.bf16.msra.mxu0 0
        %1384 = vmatprep.mubr.bf16.mxu0 0
        %1385 = vmatmul.mubr.bf16.gmra.mrb[0].mxu0 %v1350
        %v1386 = vpop.f32.mrb[0].mxu0
        %v1387 = vadd.f32 %v1335, %v1386
        %v1388 = vpop.f32.mrb[0].mxu0
        %v1389 = vpop.f32.mrb[0].mxu0
        %v1390 = vpop.f32.mrb[0].mxu0
        %1391 = vdwg.mxu0
        %v1392 = vadd.f32 %v683, %v1387
        %v1393 = vld [vmem:[%s671] sm:$0x1]
        %v1394 = vld [vmem:[%s674] sm:$0x1]
        %v1395 = vsel %vm719, %v1392, 0.0
        %1396 = vadd.xlane.f32.xlu0 %v1395
        %v1397 = vpop.xlane.xlu0 %1396
        %v1398 = vmul.f32 %v1397, %v723
        %v1399 = vsub.f32 %v1392, %v1398
        %v1400 = vmul.f32 %v1399, %v1399
        %v1401 = vsel %vm719, %v1400, 0.0
        %1402 = vadd.xlane.f32.xlu0 %v1401
        %v1403 = vpop.xlane.xlu0 %1402
        %v1404 = vmul.f32 %v1403, %v730
        %v1405 = vrsqrt.pop %v1404
        %v1406 = vmul.f32 %v1404, %v1405
        %vm1407 = vcmp.eq.f32.partialorder %v1404, inf
        %v1408 = vsel %vm1407, %v1404, %v1406
        %vm1409 = vcmp.eq.f32.partialorder %v1404, 0.0
        %v1410 = vand.u32 %v1404, 2147483648
        %v1411 = vsel %vm1409, %v1410, %v1408
        %v1412 = vadd.f32 %v1411, 1e-06
        %v1413 = vrcp.pop %v1412
        %v1415 = vlaneseq
        %v1416 = vshrl.u32 %v1415, 7
        %v1417 = vsub.s32 0, %v1416
        %v1418 = vrot.slane %v1393, %v1417
        %v1420 = vmul.f32 %v1418, %v1399
        %v1421 = vmul.f32 %v1420, %v1413
        %v1423 = vlaneseq
        %v1424 = vshrl.u32 %v1423, 7
        %v1425 = vsub.s32 0, %v1424
        %v1426 = vrot.slane %v1394, %v1425
        %v1428 = vadd.f32 %v1421, %v1426
        %v1429 = vpack.c.bf16 %v1428, %v1428
        %v1430 = vld [vmem:[%s659] sm:$0x1]
        %v1432 = vlaneseq
        %v1433 = vshrl.u32 %v1432, 7
        %v1434 = vsub.s32 0, %v1433
        %v1435 = vrot.slane %v1430, %v1434
        %v1441 = vunpack.c.l.b16 %v702
        %v1442 = vunpack.c.l.b16 %v703
        %v1443 = vunpack.c.l.b16 %v704
        %v1444 = vunpack.c.l.b16 %v705
        %v1445 = vpack.c.b16 %v1442, %v1441
        %v1446 = vpack.c.b16 %v1444, %v1443
        %v1450 = vsel %vm719, %v1429, 0
        %1452 = vmatprep.subr.bf16.mxu0 0
        %1453 = vmatpush1.bf16.msra.mxu0 %v1445
        %1454 = vmatprep.subr.bf16.mxu0 0
        %1455 = vmatpush1.bf16.msra.mxu0 %v1446
        %1456 = vmatprep.subr.bf16.mxu0 0
        %1457 = vmatpush1.bf16.msra.mxu0 0
        %1458 = vmatprep.subr.bf16.mxu0 0
        %1459 = vmatpush1.bf16.msra.mxu0 0
        %1460 = vmatprep.subr.bf16.mxu0 0
        %1461 = vmatpush1.bf16.msra.mxu0 0
        %1462 = vmatprep.subr.bf16.mxu0 0
        %1463 = vmatpush1.bf16.msra.mxu0 0
        %1464 = vmatprep.subr.bf16.mxu0 0
        %1465 = vmatpush1.bf16.msra.mxu0 0
        %1466 = vmatprep.subr.bf16.mxu0 0
        %1467 = vmatpush1.bf16.msra.mxu0 0
        %1468 = vmatprep.subr.bf16.mxu0 0
        %1469 = vmatpush1.bf16.msra.mxu0 0
        %1470 = vmatprep.subr.bf16.mxu0 0
        %1471 = vmatpush1.bf16.msra.mxu0 0
        %1472 = vmatprep.subr.bf16.mxu0 0
        %1473 = vmatpush1.bf16.msra.mxu0 0
        %1474 = vmatprep.subr.bf16.mxu0 0
        %1475 = vmatpush1.bf16.msra.mxu0 0
        %1476 = vmatprep.subr.bf16.mxu0 0
        %1477 = vmatpush1.bf16.msra.mxu0 0
        %1478 = vmatprep.subr.bf16.mxu0 0
        %1479 = vmatpush1.bf16.msra.mxu0 0
        %1480 = vmatprep.subr.bf16.mxu0 0
        %1481 = vmatpush1.bf16.msra.mxu0 0
        %1482 = vmatprep.subr.bf16.mxu0 0
        %1483 = vmatpush1.bf16.msra.mxu0 0
        %1484 = vmatprep.mubr.bf16.mxu0 0
        %1485 = vmatmul.mubr.bf16.gmra.mrb[0].mxu0 %v1450
        %v1486 = vpop.f32.mrb[0].mxu0
        %v1487 = vadd.f32 %v1435, %v1486
        %v1488 = vpop.f32.mrb[0].mxu0
        %v1489 = vpop.f32.mrb[0].mxu0
        %v1490 = vpop.f32.mrb[0].mxu0
        %1491 = vdwg.mxu0
        %v1492 = vmax.f32 %v1487, 0.0
        %v1493 = vpack.c.bf16 %v1492, %v1492
        %v1494 = vld [vmem:[%s662] sm:$0x1]
        %v1496 = vlaneseq
        %v1497 = vshrl.u32 %v1496, 7
        %v1498 = vsub.s32 0, %v1497
        %v1499 = vrot.slane %v1494, %v1498
        %v1509 = vunpack.c.l.b16 %v709
        %v1510 = vunpack.c.l.b16 %v710
        %v1511 = vunpack.c.l.b16 %v711
        %v1512 = vunpack.c.l.b16 %v712
        %v1513 = vunpack.c.l.b16 %v713
        %v1514 = vunpack.c.l.b16 %v714
        %v1515 = vunpack.c.l.b16 %v715
        %v1516 = vunpack.c.l.b16 %v716
        %v1517 = vpack.c.b16 %v1510, %v1509
        %v1518 = vpack.c.b16 %v1512, %v1511
        %v1519 = vpack.c.b16 %v1514, %v1513
        %v1520 = vpack.c.b16 %v1516, %v1515
        %vm1525 = vcmask 523264
        %v1527 = vsel %vm1525, %v1493, 0
        %1529 = vmatprep.subr.bf16.mxu0 0
        %1530 = vmatpush1.bf16.msra.mxu0 %v1517
        %1531 = vmatprep.subr.bf16.mxu0 0
        %1532 = vmatpush1.bf16.msra.mxu0 %v1518
        %1533 = vmatprep.subr.bf16.mxu0 0
        %1534 = vmatpush1.bf16.msra.mxu0 %v1519
        %1535 = vmatprep.subr.bf16.mxu0 0
        %1536 = vmatpush1.bf16.msra.mxu0 %v1520
        %1537 = vmatprep.subr.bf16.mxu0 0
        %1538 = vmatpush1.bf16.msra.mxu0 0
        %1539 = vmatprep.subr.bf16.mxu0 0
        %1540 = vmatpush1.bf16.msra.mxu0 0
        %1541 = vmatprep.subr.bf16.mxu0 0
        %1542 = vmatpush1.bf16.msra.mxu0 0
        %1543 = vmatprep.subr.bf16.mxu0 0
        %1544 = vmatpush1.bf16.msra.mxu0 0
        %1545 = vmatprep.subr.bf16.mxu0 0
        %1546 = vmatpush1.bf16.msra.mxu0 0
        %1547 = vmatprep.subr.bf16.mxu0 0
        %1548 = vmatpush1.bf16.msra.mxu0 0
        %1549 = vmatprep.subr.bf16.mxu0 0
        %1550 = vmatpush1.bf16.msra.mxu0 0
        %1551 = vmatprep.subr.bf16.mxu0 0
        %1552 = vmatpush1.bf16.msra.mxu0 0
        %1553 = vmatprep.subr.bf16.mxu0 0
        %1554 = vmatpush1.bf16.msra.mxu0 0
        %1555 = vmatprep.subr.bf16.mxu0 0
        %1556 = vmatpush1.bf16.msra.mxu0 0
        %1557 = vmatprep.subr.bf16.mxu0 0
        %1558 = vmatpush1.bf16.msra.mxu0 0
        %1559 = vmatprep.subr.bf16.mxu0 0
        %1560 = vmatpush1.bf16.msra.mxu0 0
        %1561 = vmatprep.mubr.bf16.mxu0 0
        %1562 = vmatmul.mubr.bf16.gmra.mrb[0].mxu0 %v1527
        %v1563 = vpop.f32.mrb[0].mxu0
        %v1564 = vadd.f32 %v1499, %v1563
        %v1565 = vpop.f32.mrb[0].mxu0
        %v1566 = vpop.f32.mrb[0].mxu0
        %v1567 = vpop.f32.mrb[0].mxu0
        %1568 = vdwg.mxu0
        %v1569 = vadd.f32 %v1392, %v1564
        %1570 = vst.msk [vmem:[#allocation2] sm:$0xff] %vm719, %v1569
        %p1571 = scmp.eq.s32.totalorder %s38, 1
        // Predicated region
        $region93: #{tpu_custom_call.1} parent=83 // pred_check
          %p1572 = pneg %p1571
        $region94: #{tpu_custom_call.1} parent=83 // pred_check_branch
          %1574 = sbr.rel (%p1572) target = $region96
        $region95: #{tpu_custom_call.1} parent=83 // pred_region
          %v1575 = vld [vmem:[%s14] sm:$0x1]
          %v1576 = vld [vmem:[%s15] sm:$0x1]
          %v1577 = vsel %vm719, %v1569, 0.0
          %1578 = vadd.xlane.f32.xlu0 %v1577
          %v1579 = vpop.xlane.xlu0 %1578
          %v1580 = vmul.f32 %v1579, %v723
          %v1581 = vsub.f32 %v1569, %v1580
          %v1582 = vmul.f32 %v1581, %v1581
          %v1583 = vsel %vm719, %v1582, 0.0
          %1584 = vadd.xlane.f32.xlu0 %v1583
          %v1585 = vpop.xlane.xlu0 %1584
          %v1586 = vmul.f32 %v1585, %v730
          %v1587 = vrsqrt.pop %v1586
          %v1588 = vmul.f32 %v1586, %v1587
          %vm1589 = vcmp.eq.f32.partialorder %v1586, inf
          %v1590 = vsel %vm1589, %v1586, %v1588
          %vm1591 = vcmp.eq.f32.partialorder %v1586, 0.0
          %v1592 = vand.u32 %v1586, 2147483648
          %v1593 = vsel %vm1591, %v1592, %v1590
          %v1594 = vadd.f32 %v1593, 1e-06
          %v1595 = vrcp.pop %v1594
          %v1597 = vlaneseq
          %v1598 = vshrl.u32 %v1597, 7
          %v1599 = vsub.s32 0, %v1598
          %v1600 = vrot.slane %v1575, %v1599
          %v1602 = vmul.f32 %v1600, %v1581
          %v1603 = vmul.f32 %v1602, %v1595
          %v1605 = vlaneseq
          %v1606 = vshrl.u32 %v1605, 7
          %v1607 = vsub.s32 0, %v1606
          %v1608 = vrot.slane %v1576, %v1607
          %v1610 = vadd.f32 %v1603, %v1608
          %1611 = vst.msk [vmem:[%s647] sm:$0xff] %vm719, %v1610
        $region96: #{tpu_custom_call.1} parent=83 // pred_fallthru
          _
        %s1612 = sand.u32 %s439, 1
        %s1613 = scalar_lea.sflag [#allocation6], %s1612
        %s1614 = sand.u32 %s439, 1
        %s1615 = smul.addr %s1614, 8
        %s1616 = scalar_lea.vmem [#allocation7], %s1615
        // Predicated region
        $region97: #{tpu_custom_call.1} parent=83 // pred_check
          %p1617 = pneg %p449
        $region98: #{tpu_custom_call.1} parent=83 // pred_check_branch
          %1619 = sbr.rel (%p1617) target = $region100
        $region99: #{tpu_custom_call.1} parent=83 // pred_region
          %s1621 = ssub.s32 128, 128
          %1622 = vsyncadd %s1613, %s1621
          %s1623 = smul.addr %s37, 128
          %s1624 = scalar_lea.hbm %s16, %s1623
          %s1626 = sshll.u32 %s1616, 4
          %s1627 = int_to_ptr.vmem [resolvable:$true] %s1626
          %1629 = dma.vmem_to_hbm [thread:$0]  %s1627, 128, %s1624, %s1613
        $region100: #{tpu_custom_call.1} parent=83 // pred_fallthru
          _
      $region84: #{tpu_custom_call.1} parent=5 // pred_fallthru
        _
      %p1630 = scmp.le.s32.totalorder 2, %s28
      // Predicated region
      $region101: #{tpu_custom_call.1} parent=5 // pred_check
        %p1631 = pneg %p1630
      $region102: #{tpu_custom_call.1} parent=5 // pred_check_branch
        %1633 = sbr.rel (%p1631) target = $region104
      $region103: #{tpu_custom_call.1} parent=5 // pred_region
        %s1634 = ssub.s32 %s28, 2
        // Predicated region
        $region105: #{tpu_custom_call.1} parent=103 // pred_check
          %p1635 = pneg %p455
        $region106: #{tpu_custom_call.1} parent=103 // pred_check_branch
          %1637 = sbr.rel (%p1635) target = $region108
        $region107: #{tpu_custom_call.1} parent=103 // pred_region
          %s1638 = sand.u32 %s440, 1
          %s1639 = scalar_lea.sflag [#allocation6], %s1638
          %s1640 = sand.u32 %s440, 1
          %s1641 = smul.addr %s1640, 8
          %s1642 = scalar_lea.vmem [#allocation7], %s1641
          %1643 = dma.done %s1639, 128
        $region108: #{tpu_custom_call.1} parent=103 // pred_fallthru
          _
      $region104: #{tpu_custom_call.1} parent=5 // pred_fallthru
        _
    $region6: #{tpu_custom_call.1} parent=1 // loop_footer
      %s32 = sadd.s32 1, %s28
    $region7: #{tpu_custom_call.1} parent=1 // loop_footer_branch
      %27 = sbr.rel target = $region3
    $region8: #{tpu_custom_call.1} parent=1 // loop_exit
      _
    %1644 = vsyncpa [#allocation5], 1
    %s1645 = scalar_lea.sflag [#allocation5], 1
    %1646 = vsyncpa %s1645, 1
    %1647 = vsyncpa [#allocation6], 1
    %s1648 = scalar_lea.sflag [#allocation6], 1
    %1649 = vsyncpa %s1648, 1

</llo_original>
